<compile_context>
chip_gen: v7x
topology: tpu7x:2x2x1
jax: 0.10.0
libtpu: 0.0.40
codegen_flags: <defaults>
</compile_context>

<pallas_src>
import functools

import jax
import jax.numpy as jnp
from jax.experimental import pallas as pl
from jax.experimental.pallas import tpu as pltpu


def _round_up(x, m):
    return ((x + m - 1) // m) * m


def _sigmoid(x):
    # exp + approximate reciprocal both ride the EUP slot instead of the VALU.
    return pl.reciprocal(1.0 + jnp.exp(-x), approx=True)


def _egc_main_kernel(
    node_ref, edge_ref, idx_i_ref, idx_j_ref,
    w_node3_ref, b_node3_ref,        # fused [src_gate | dst_gate | dst_update]
    w_edge_ref, b_edge_ref,          # edge_gate
    w_src_ref, b_src_ref,            # src_update (applied once at finalize)
    gamma_n_ref, beta_n_ref,         # bn_nodes
    gamma_e_ref, beta_e_ref,         # bn_edges
    x_out_ref, y_raw_ref, scale_e_ref, shift_e_ref,
    hnode_ref, acc_ref, ysum_ref, ysq_ref,
    *, n_valid_edges,
):
    n, f = node_ref.shape
    te = edge_ref.shape[0]
    step = pl.program_id(0)
    n_steps = pl.num_programs(0)
    is_last = step == n_steps - 1

    # ---- init (first edge tile): fused node projections + zero accumulators.
    @pl.when(step == 0)
    def _init():
        hn = (jnp.dot(node_ref[...], w_node3_ref[...],
                      preferred_element_type=jnp.float32) + b_node3_ref[...])
        hnode_ref[...] = hn.astype(jnp.bfloat16)      # [N, 3F] gather columns
        acc_ref[...] = jnp.zeros_like(acc_ref)
        ysum_ref[...] = jnp.zeros_like(ysum_ref)
        ysq_ref[...] = jnp.zeros_like(ysq_ref)

    # One-hot gather/scatter matrices rebuilt in-register from int32 indices
    # (no HBM traffic).  0/1 are exact in bf16 -> bf16 MXU operands.
    lane = jax.lax.broadcasted_iota(jnp.int32, (te, n), 1)
    gi = (idx_i_ref[...] == lane).astype(jnp.bfloat16)      # [TE, N]
    gj = (idx_j_ref[...] == lane).astype(jnp.bfloat16)      # [TE, N]

    # Gather: src_gate rows via gi; (dst_gate | dst_update) rows fused via gj.
    e_src = jnp.dot(gi, hnode_ref[:, :f], preferred_element_type=jnp.float32)
    gj_cat = jnp.dot(gj, hnode_ref[:, f:], preferred_element_type=jnp.float32)
    e_dst = gj_cat[:, :f]
    bh = gj_cat[:, f:]

    h_edge = (jnp.dot(edge_ref[...], w_edge_ref[...],
                      preferred_element_type=jnp.float32) + b_edge_ref[...])

    y = e_src + e_dst + h_edge                     # [TE, F] pre-BN edge feats
    sigma = _sigmoid(y)
    m = bh * sigma

    # Scatter-add of m / sigma back to nodes by contracting gi's edge axis
    # (no gi.T materialization, no concatenate; straight into acc slices).
    dn = (((0,), (0,)), ((), ()))
    acc_ref[:, :f] += jax.lax.dot_general(
        gi, m.astype(jnp.bfloat16), dimension_numbers=dn,
        preferred_element_type=jnp.float32)
    acc_ref[:, f:] += jax.lax.dot_general(
        gi, sigma.astype(jnp.bfloat16), dimension_numbers=dn,
        preferred_element_type=jnp.float32)

    y_raw_ref[...] = y.astype(y_raw_ref.dtype)     # bf16 round trip to pass 2

    # Streaming edge-BN statistics; only the last tile can hold padded rows,
    # so the validity mask is applied only there.
    @pl.when(step < n_steps - 1)
    def _stats_plain():
        ysum_ref[...] += jnp.sum(y, axis=0, keepdims=True)
        ysq_ref[...] += jnp.sum(y * y, axis=0, keepdims=True)

    # ---- finalize (last edge tile): node path + global edge-BN scale/shift.
    @pl.when(is_last)
    def _finalize():
        row = jax.lax.broadcasted_iota(jnp.int32, (te, 1), 0) + step * te
        valid = (row < n_valid_edges).astype(jnp.float32)
        ysum_ref[...] += jnp.sum(y * valid, axis=0, keepdims=True)
        ysq_ref[...] += jnp.sum((y * y) * valid, axis=0, keepdims=True)

        sum_sigma_h = acc_ref[:, :f]
        sum_sigma = acc_ref[:, f:]
        h = sum_sigma_h / (sum_sigma + 1e-6)       # exact divide (runs once)
        xsrc = (jnp.dot(node_ref[...], w_src_ref[...],
                        preferred_element_type=jnp.float32) + b_src_ref[...])
        x = xsrc + h

        mu = jnp.mean(x, axis=0, keepdims=True)
        var = jnp.mean((x - mu) * (x - mu), axis=0, keepdims=True)
        xb = (gamma_n_ref[...] * (x - mu) * jax.lax.rsqrt(var + 1e-5)
              + beta_n_ref[...])
        x_out_ref[...] = node_ref[...] + xb * _sigmoid(xb)   # SiLU + residual

        inv_e = 1.0 / float(n_valid_edges)
        mean_e = ysum_ref[...] * inv_e
        var_e = jnp.maximum(ysq_ref[...] * inv_e - mean_e * mean_e, 0.0)
        scale = gamma_e_ref[...] * jax.lax.rsqrt(var_e + 1e-5)
        scale_e_ref[...] = scale
        shift_e_ref[...] = beta_e_ref[...] - mean_e * scale


def _egc_edge_apply_kernel(y_raw_ref, edge_ref, scale_ref, shift_ref, y_out_ref):
    # Apply global edge-BN (as scale/shift) + SiLU + residual, tile by tile.
    y = y_raw_ref[...].astype(jnp.float32)
    yb = y * scale_ref[...] + shift_ref[...]
    y_out_ref[...] = edge_ref[...] + yb * _sigmoid(yb)


def _vmem_limit_bytes(n_nodes, te, f):
    est = 0
    est += 2 * te * f * 4                 # edge tile (double buffered)
    est += 2 * te * f * 2                 # y_raw bf16 output tile
    est += 4 * te * 128 * 4               # idx_i/idx_j (te,1) tiles, lane padded
    est += 2 * n_nodes * f * 4            # node_feats resident + x_out
    est += (5 * f * f + 16 * f) * 4       # weights / biases / bn params
    est += n_nodes * 3 * f * 2            # hnode bf16 scratch
    est += n_nodes * 2 * f * 4            # scatter accumulator
    est += 2 * te * max(n_nodes, 128) * 2 # in-register one-hots (gi, gj)
    est += 8 * te * f * 4                 # elementwise temporaries
    return int(min(max(2 * est, 24 * 1024 * 1024), 48 * 1024 * 1024))


def edge_gated_graph_conv(node_feats, edge_feats, edge_index, params, *, e_tile=1024):
    """Forward pass of EdgeGatedGraphConv (residual=True, train-mode BN).

    params: pre-transposed Linear weights [F_in, F_out], biases [1, F_out],
    BN gamma/beta [1, F_out].  Requires F_in == F_out (residual connection).
    On v7x prefer roughly half the default e_tile (64 MiB VMEM per core).
    """
    n_nodes, f = node_feats.shape
    n_edges, f_e = edge_feats.shape
    assert f == f_e, "residual path requires input_features == output_features"
    idx_i = edge_index[0].astype(jnp.int32)
    idx_j = edge_index[1].astype(jnp.int32)

    # Fused node-side gather weights: [src_gate | dst_gate | dst_update].
    w_node3 = jnp.concatenate(
        [params["w_src_gate"], params["w_dst_gate"], params["w_dst_update"]], axis=1)
    b_node3 = jnp.concatenate(
        [params["b_src_gate"], params["b_dst_gate"], params["b_dst_update"]], axis=1)

    # Edge tiling (pad E to a multiple of the tile; padded rows are masked).
    te = min(_round_up(max(e_tile, 8), 8), _round_up(n_edges, 8))
    e_pad = _round_up(n_edges, te)
    pad = e_pad - n_edges

    edge_p = jnp.pad(edge_feats, ((0, pad), (0, 0))) if pad else edge_feats
    if pad:
        # Out-of-range index (= n_nodes) -> all-zero one-hot row for padded edges.
        fill = jnp.full((pad,), n_nodes, jnp.int32)
        idx_i = jnp.concatenate([idx_i, fill])
        idx_j = jnp.concatenate([idx_j, fill])
    idx_i_col = idx_i.reshape(e_pad, 1)
    idx_j_col = idx_j.reshape(e_pad, 1)

    n_tiles = e_pad // te
    kernel = functools.partial(_egc_main_kernel, n_valid_edges=n_edges)

    const = lambda e: (0, 0)
    tiled = lambda e: (e, 0)

    x_out, y_raw, scale_e, shift_e = pl.pallas_call(
        kernel,
        out_shape=(
            jax.ShapeDtypeStruct((n_nodes, f), jnp.float32),   # x (nodes)
            jax.ShapeDtypeStruct((e_pad, f), jnp.bfloat16),    # y pre-BN (bf16)
            jax.ShapeDtypeStruct((1, f), jnp.float32),         # edge-BN scale
            jax.ShapeDtypeStruct((1, f), jnp.float32),         # edge-BN shift
        ),
        grid=(n_tiles,),
        in_specs=[
            pl.BlockSpec((n_nodes, f), const),       # node_feats (resident)
            pl.BlockSpec((te, f), tiled),            # edge_feats tile
            pl.BlockSpec((te, 1), tiled),            # idx_i tile (int32)
            pl.BlockSpec((te, 1), tiled),            # idx_j tile (int32)
            pl.BlockSpec((f, 3 * f), const),         # fused gather weight
            pl.BlockSpec((1, 3 * f), const),         # fused gather bias
            pl.BlockSpec((f, f), const),             # edge_gate weight
            pl.BlockSpec((1, f), const),             # edge_gate bias
            pl.BlockSpec((f, f), const),             # src_update weight
            pl.BlockSpec((1, f), const),             # src_update bias
            pl.BlockSpec((1, f), const),             # gamma_nodes
            pl.BlockSpec((1, f), const),             # beta_nodes
            pl.BlockSpec((1, f), const),             # gamma_edges
            pl.BlockSpec((1, f), const),             # beta_edges
        ],
        out_specs=(
            pl.BlockSpec((n_nodes, f), const),
            pl.BlockSpec((te, f), tiled),
            pl.BlockSpec((1, f), const),
            pl.BlockSpec((1, f), const),
        ),
        scratch_shapes=[
            pltpu.VMEM((n_nodes, 3 * f), jnp.bfloat16),   # gather projections
            pltpu.VMEM((n_nodes, 2 * f), jnp.float32),    # scatter accumulator
            pltpu.VMEM((1, f), jnp.float32),              # sum(y)
            pltpu.VMEM((1, f), jnp.float32),              # sum(y*y)
        ],
        compiler_params=pltpu.CompilerParams(
            dimension_semantics=("arbitrary",),
            vmem_limit_bytes=_vmem_limit_bytes(n_nodes, te, f)),
    )(node_feats, edge_p, idx_i_col, idx_j_col, w_node3, b_node3,
      params["w_edge_gate"], params["b_edge_gate"],
      params["w_src_update"], params["b_src_update"],
      params["gamma_nodes"], params["beta_nodes"],
      params["gamma_edges"], params["beta_edges"])

    # Second pass: elementwise BN-apply + SiLU + residual on larger tiles
    # to amortize per-step grid overhead (pass is purely HBM-bound).
    g = 1
    for cand in (4, 2):
        if n_tiles % cand == 0 and te * cand * f * 20 <= 24 * 1024 * 1024:
            g = cand
            break
    te2 = te * g
    n_tiles2 = n_tiles // g

    y_out = pl.pallas_call(
        _egc_edge_apply_kernel,
        out_shape=jax.ShapeDtypeStruct((e_pad, f), jnp.float32),
        grid=(n_tiles2,),
        in_specs=[
            pl.BlockSpec((te2, f), tiled),
            pl.BlockSpec((te2, f), tiled),
            pl.BlockSpec((1, f), const),
            pl.BlockSpec((1, f), const),
        ],
        out_specs=pl.BlockSpec((te2, f), tiled),
        compiler_params=pltpu.CompilerParams(
            dimension_semantics=("parallel",),
            vmem_limit_bytes=int(min(max(28 * te2 * f, 16 * 1024 * 1024),
                                     48 * 1024 * 1024))),
    )(y_raw, edge_p, scale_e, shift_e)

    return x_out, y_out[:n_edges]


def init_params(key, f_in, f_out):
    keys = jax.random.split(key, 10)
    scale = 1.0 / jnp.sqrt(jnp.float32(f_in))

    def w(k):
        # [F_in, F_out]  (pre-transposed nn.Linear weight)
        return (jax.random.uniform(k, (f_in, f_out), jnp.float32) * 2.0 - 1.0) * scale

    def b(k):
        return (jax.random.uniform(k, (1, f_out), jnp.float32) * 2.0 - 1.0) * scale

    return {
        "w_src_gate": w(keys[0]), "b_src_gate": b(keys[1]),
        "w_dst_gate": w(keys[2]), "b_dst_gate": b(keys[3]),
        "w_edge_gate": w(keys[4]), "b_edge_gate": b(keys[5]),
        "w_src_update": w(keys[6]), "b_src_update": b(keys[7]),
        "w_dst_update": w(keys[8]), "b_dst_update": b(keys[9]),
        "gamma_nodes": jnp.ones((1, f_out), jnp.float32),
        "beta_nodes": jnp.zeros((1, f_out), jnp.float32),
        "gamma_edges": jnp.ones((1, f_out), jnp.float32),
        "beta_edges": jnp.zeros((1, f_out), jnp.float32),
    }


def _reference(node_feats, edge_feats, edge_index, params):
    """Pure-JAX reference matching the PyTorch forward (train-mode BN)."""
    idx_i, idx_j = edge_index[0], edge_index[1]
    lin = lambda x, w, b: x @ w + b
    e_src = lin(node_feats, params["w_src_gate"], params["b_src_gate"])[idx_i]
    e_dst = lin(node_feats, params["w_dst_gate"], params["b_dst_gate"])[idx_j]
    y = e_src + e_dst + lin(edge_feats, params["w_edge_gate"], params["b_edge_gate"])
    sigma = jax.nn.sigmoid(y)
    bh = lin(node_feats, params["w_dst_update"], params["b_dst_update"])[idx_j]
    m = bh * sigma
    n, f = node_feats.shape[0], y.shape[1]
    sum_sigma_h = jnp.zeros((n, f), jnp.float32).at[idx_i].add(m)
    sum_sigma = jnp.zeros((n, f), jnp.float32).at[idx_i].add(sigma)
    h = sum_sigma_h / (sum_sigma + 1e-6)
    x = lin(node_feats, params["w_src_update"], params["b_src_update"]) + h

    def bn_silu(v, g, b):
        mu = jnp.mean(v, axis=0, keepdims=True)
        var = jnp.mean((v - mu) ** 2, axis=0, keepdims=True)
        o = g * (v - mu) * jax.lax.rsqrt(var + 1e-5) + b
        return o * jax.nn.sigmoid(o)

    x = node_feats + bn_silu(x, params["gamma_nodes"], params["beta_nodes"])
    y = edge_feats + bn_silu(y, params["gamma_edges"], params["beta_edges"])
    return x, y


if __name__ == "__main__":
    # Small synthetic graph: 16 nodes, 64 edges, hidden = 128 (in == out for residual).
    N, E, F = 16, 64, 128

    key = jax.random.PRNGKey(0)
    k_node, k_edge, k_i, k_j, k_param = jax.random.split(key, 5)

    node_feats = jax.random.normal(k_node, (N, F), jnp.float32)
    edge_feats = jax.random.normal(k_edge, (E, F), jnp.float32)
    idx_i = jax.random.randint(k_i, (E,), 0, N, jnp.int32)
    idx_j = jax.random.randint(k_j, (E,), 0, N, jnp.int32)
    edge_index = jnp.stack([idx_i, idx_j], axis=0)

    params = init_params(k_param, F, F)

    # e_tile=32 exercises the multi-step edge grid even at this toy size.
    x_out, y_out = edge_gated_graph_conv(node_feats, edge_feats, edge_index,
                                         params, e_tile=32)
    jax.block_until_ready((x_out, y_out))

    assert x_out.shape == (N, F) and y_out.shape == (E, F)

    x_ref, y_ref = _reference(node_feats, edge_feats, edge_index, params)
    err_x = float(jnp.max(jnp.abs(x_out - x_ref)))
    err_y = float(jnp.max(jnp.abs(y_out - y_ref)))
    assert err_x < 1e-1 and err_y < 1e-1, (err_x, err_y)

    print("KERNEL_OK")
</pallas_src>

<mosaic_0001>
module attributes {stable_mosaic.version = 11 : i64} {
  func.func @_egc_main_kernel(%arg0: i32, %arg1: memref<16x128xf32, #tpu.memory_space<vmem>>, %arg2: memref<32x128xf32, #tpu.memory_space<vmem>>, %arg3: memref<32x1xi32, #tpu.memory_space<vmem>>, %arg4: memref<32x1xi32, #tpu.memory_space<vmem>>, %arg5: memref<128x384xf32, #tpu.memory_space<vmem>>, %arg6: memref<1x384xf32, #tpu.memory_space<vmem>>, %arg7: memref<128x128xf32, #tpu.memory_space<vmem>>, %arg8: memref<1x128xf32, #tpu.memory_space<vmem>>, %arg9: memref<128x128xf32, #tpu.memory_space<vmem>>, %arg10: memref<1x128xf32, #tpu.memory_space<vmem>>, %arg11: memref<1x128xf32, #tpu.memory_space<vmem>>, %arg12: memref<1x128xf32, #tpu.memory_space<vmem>>, %arg13: memref<1x128xf32, #tpu.memory_space<vmem>>, %arg14: memref<1x128xf32, #tpu.memory_space<vmem>>, %arg15: memref<16x128xf32, #tpu.memory_space<vmem>>, %arg16: memref<32x128xbf16, #tpu.memory_space<vmem>>, %arg17: memref<1x128xf32, #tpu.memory_space<vmem>>, %arg18: memref<1x128xf32, #tpu.memory_space<vmem>>, %arg19: memref<16x384xbf16, #tpu.memory_space<vmem>>, %arg20: memref<16x256xf32, #tpu.memory_space<vmem>>, %arg21: memref<1x128xf32, #tpu.memory_space<vmem>>, %arg22: memref<1x128xf32, #tpu.memory_space<vmem>>) attributes {dimension_semantics = [#tpu.dimension_semantics<arbitrary>], iteration_bounds = array<i64: 2>, scalar_prefetch = 0 : i64, scratch_operands = 4 : i64, tpu.core_type = #tpu.core_type<tc>, window_params = [{pipeline_mode = #tpu.pipeline_mode<synchronous>, transform_indices = @transform_0, window_bounds = array<i64: 16, 128>}, {transform_indices = @transform_1, window_bounds = array<i64: 32, 128>}, {transform_indices = @transform_2, window_bounds = array<i64: 32, 1>}, {transform_indices = @transform_3, window_bounds = array<i64: 32, 1>}, {pipeline_mode = #tpu.pipeline_mode<synchronous>, transform_indices = @transform_4, window_bounds = array<i64: 128, 384>}, {pipeline_mode = #tpu.pipeline_mode<synchronous>, transform_indices = @transform_5, window_bounds = array<i64: 1, 384>}, {pipeline_mode = #tpu.pipeline_mode<synchronous>, transform_indices = @transform_6, window_bounds = array<i64: 128, 128>}, {pipeline_mode = #tpu.pipeline_mode<synchronous>, transform_indices = @transform_7, window_bounds = array<i64: 1, 128>}, {pipeline_mode = #tpu.pipeline_mode<synchronous>, transform_indices = @transform_8, window_bounds = array<i64: 128, 128>}, {pipeline_mode = #tpu.pipeline_mode<synchronous>, transform_indices = @transform_9, window_bounds = array<i64: 1, 128>}, {pipeline_mode = #tpu.pipeline_mode<synchronous>, transform_indices = @transform_10, window_bounds = array<i64: 1, 128>}, {pipeline_mode = #tpu.pipeline_mode<synchronous>, transform_indices = @transform_11, window_bounds = array<i64: 1, 128>}, {pipeline_mode = #tpu.pipeline_mode<synchronous>, transform_indices = @transform_12, window_bounds = array<i64: 1, 128>}, {pipeline_mode = #tpu.pipeline_mode<synchronous>, transform_indices = @transform_13, window_bounds = array<i64: 1, 128>}, {pipeline_mode = #tpu.pipeline_mode<synchronous>, transform_indices = @transform_14, window_bounds = array<i64: 16, 128>}, {transform_indices = @transform_15, window_bounds = array<i64: 32, 128>}, {pipeline_mode = #tpu.pipeline_mode<synchronous>, transform_indices = @transform_16, window_bounds = array<i64: 1, 128>}, {pipeline_mode = #tpu.pipeline_mode<synchronous>, transform_indices = @transform_17, window_bounds = array<i64: 1, 128>}]} {
    %c1_i32 = arith.constant 1 : i32
    %0 = arith.cmpi eq, %arg0, %c1_i32 : i32
    %c0_i32 = arith.constant 0 : i32
    %1 = arith.cmpi eq, %arg0, %c0_i32 : i32
    %2 = arith.extui %1 : i1 to i32
    %c0_i32_0 = arith.constant 0 : i32
    %3 = arith.cmpi ne, %2, %c0_i32_0 : i32
    scf.if %3 {
      %c0_32 = arith.constant 0 : index
      %c0_33 = arith.constant 0 : index
      %55 = vector.load %arg1[%c0_32, %c0_33] : memref<16x128xf32, #tpu.memory_space<vmem>>, vector<16x128xf32>
      %c0_34 = arith.constant 0 : index
      %c0_35 = arith.constant 0 : index
      %56 = vector.load %arg5[%c0_34, %c0_35] : memref<128x384xf32, #tpu.memory_space<vmem>>, vector<128x384xf32>
      %cst_36 = arith.constant dense<0.000000e+00> : vector<16x384xf32>
      %57 = tpu.matmul %55, %56, %cst_36 {dimension_numbers = #tpu.dot_dimension_numbers<[1], [0], [0], [1], [0, 0, 1, 1], [], []>} : vector<16x128xf32>, vector<128x384xf32>, vector<16x384xf32> -> vector<16x384xf32>
      %c0_37 = arith.constant 0 : index
      %c0_38 = arith.constant 0 : index
      %58 = vector.load %arg6[%c0_37, %c0_38] : memref<1x384xf32, #tpu.memory_space<vmem>>, vector<1x384xf32>
      %59 = vector.broadcast %58 : vector<1x384xf32> to vector<16x384xf32>
      %60 = arith.addf %57, %59 : vector<16x384xf32>
      %61 = arith.truncf %60 : vector<16x384xf32> to vector<16x384xbf16>
      %c0_39 = arith.constant 0 : index
      %c0_40 = arith.constant 0 : index
      %62 = vector.load %arg19[%c0_39, %c0_40] : memref<16x384xbf16, #tpu.memory_space<vmem>>, vector<16x384xbf16>
      tpu.vector_store %arg19[%c0_39, %c0_40], %61 {strides = array<i32>} : memref<16x384xbf16, #tpu.memory_space<vmem>>, vector<16x384xbf16>,
      %cst_41 = arith.constant 0.000000e+00 : f32
      %63 = vector.broadcast %cst_41 : f32 to vector<16x256xf32>
      %c0_42 = arith.constant 0 : index
      %c0_43 = arith.constant 0 : index
      %64 = vector.load %arg20[%c0_42, %c0_43] : memref<16x256xf32, #tpu.memory_space<vmem>>, vector<16x256xf32>
      tpu.vector_store %arg20[%c0_42, %c0_43], %63 {strides = array<i32>} : memref<16x256xf32, #tpu.memory_space<vmem>>, vector<16x256xf32>,
      %cst_44 = arith.constant 0.000000e+00 : f32
      %65 = vector.broadcast %cst_44 : f32 to vector<1x128xf32>
      %c0_45 = arith.constant 0 : index
      %c0_46 = arith.constant 0 : index
      %66 = vector.load %arg21[%c0_45, %c0_46] : memref<1x128xf32, #tpu.memory_space<vmem>>, vector<1x128xf32>
      tpu.vector_store %arg21[%c0_45, %c0_46], %65 {strides = array<i32>} : memref<1x128xf32, #tpu.memory_space<vmem>>, vector<1x128xf32>,
      %cst_47 = arith.constant 0.000000e+00 : f32
      %67 = vector.broadcast %cst_47 : f32 to vector<1x128xf32>
      %c0_48 = arith.constant 0 : index
      %c0_49 = arith.constant 0 : index
      %68 = vector.load %arg22[%c0_48, %c0_49] : memref<1x128xf32, #tpu.memory_space<vmem>>, vector<1x128xf32>
      tpu.vector_store %arg22[%c0_48, %c0_49], %67 {strides = array<i32>} : memref<1x128xf32, #tpu.memory_space<vmem>>, vector<1x128xf32>,
    } else {
    }
    %4 = tpu.iota {dimensions = array<i32: 1>} : vector<32x16xi32>
    %c0 = arith.constant 0 : index
    %c0_1 = arith.constant 0 : index
    %5 = vector.load %arg3[%c0, %c0_1] : memref<32x1xi32, #tpu.memory_space<vmem>>, vector<32x1xi32>
    %6 = vector.broadcast %5 : vector<32x1xi32> to vector<32x16xi32>
    %7 = arith.cmpi eq, %6, %4 : vector<32x16xi32>
    %8 = arith.extui %7 : vector<32x16xi1> to vector<32x16xi32>
    %9 = arith.sitofp %8 : vector<32x16xi32> to vector<32x16xf32>
    %10 = arith.truncf %9 : vector<32x16xf32> to vector<32x16xbf16>
    %c0_2 = arith.constant 0 : index
    %c0_3 = arith.constant 0 : index
    %11 = vector.load %arg4[%c0_2, %c0_3] : memref<32x1xi32, #tpu.memory_space<vmem>>, vector<32x1xi32>
    %12 = vector.broadcast %11 : vector<32x1xi32> to vector<32x16xi32>
    %13 = arith.cmpi eq, %12, %4 : vector<32x16xi32>
    %14 = arith.extui %13 : vector<32x16xi1> to vector<32x16xi32>
    %15 = arith.sitofp %14 : vector<32x16xi32> to vector<32x16xf32>
    %16 = arith.truncf %15 : vector<32x16xf32> to vector<32x16xbf16>
    %c0_4 = arith.constant 0 : index
    %c0_5 = arith.constant 0 : index
    %17 = vector.load %arg19[%c0_4, %c0_5] : memref<16x384xbf16, #tpu.memory_space<vmem>>, vector<16x128xbf16>
    %cst = arith.constant dense<0.000000e+00> : vector<32x128xf32>
    %18 = tpu.matmul %10, %17, %cst {dimension_numbers = #tpu.dot_dimension_numbers<[1], [0], [0], [1], [0, 0, 1, 1], [], []>} : vector<32x16xbf16>, vector<16x128xbf16>, vector<32x128xf32> -> vector<32x128xf32>
    %c0_6 = arith.constant 0 : index
    %c128 = arith.constant 128 : index
    %19 = vector.load %arg19[%c0_6, %c128] : memref<16x384xbf16, #tpu.memory_space<vmem>>, vector<16x256xbf16>
    %cst_7 = arith.constant dense<0.000000e+00> : vector<32x256xf32>
    %20 = tpu.matmul %16, %19, %cst_7 {dimension_numbers = #tpu.dot_dimension_numbers<[1], [0], [0], [1], [0, 0, 1, 1], [], []>} : vector<32x16xbf16>, vector<16x256xbf16>, vector<32x256xf32> -> vector<32x256xf32>
    %21 = vector.extract_strided_slice %20 {offsets = [0, 0], sizes = [32, 128], strides = [1, 1]} : vector<32x256xf32> to vector<32x128xf32>
    %22 = vector.extract_strided_slice %20 {offsets = [0, 128], sizes = [32, 128], strides = [1, 1]} : vector<32x256xf32> to vector<32x128xf32>
    %c0_8 = arith.constant 0 : index
    %c0_9 = arith.constant 0 : index
    %23 = vector.load %arg2[%c0_8, %c0_9] : memref<32x128xf32, #tpu.memory_space<vmem>>, vector<32x128xf32>
    %c0_10 = arith.constant 0 : index
    %c0_11 = arith.constant 0 : index
    %24 = vector.load %arg7[%c0_10, %c0_11] : memref<128x128xf32, #tpu.memory_space<vmem>>, vector<128x128xf32>
    %cst_12 = arith.constant dense<0.000000e+00> : vector<32x128xf32>
    %25 = tpu.matmul %23, %24, %cst_12 {dimension_numbers = #tpu.dot_dimension_numbers<[1], [0], [0], [1], [0, 0, 1, 1], [], []>} : vector<32x128xf32>, vector<128x128xf32>, vector<32x128xf32> -> vector<32x128xf32>
    %c0_13 = arith.constant 0 : index
    %c0_14 = arith.constant 0 : index
    %26 = vector.load %arg8[%c0_13, %c0_14] : memref<1x128xf32, #tpu.memory_space<vmem>>, vector<1x128xf32>
    %27 = vector.broadcast %26 : vector<1x128xf32> to vector<32x128xf32>
    %28 = arith.addf %25, %27 : vector<32x128xf32>
    %29 = arith.addf %18, %21 : vector<32x128xf32>
    %30 = arith.addf %29, %28 : vector<32x128xf32>
    %cst_15 = arith.constant 0.000000e+00 : f32
    %31 = vector.broadcast %cst_15 : f32 to vector<32x128xf32>
    %32 = arith.subf %31, %30 : vector<32x128xf32>
    %33 = math.exp %32 : vector<32x128xf32>
    %cst_16 = arith.constant 1.000000e+00 : f32
    %34 = vector.broadcast %cst_16 : f32 to vector<32x128xf32>
    %35 = arith.addf %34, %33 : vector<32x128xf32>
    %36 = tpu.reciprocal %35 {approx = true} : vector<32x128xf32> -> vector<32x128xf32>
    %37 = arith.mulf %22, %36 : vector<32x128xf32>
    %c0_17 = arith.constant 0 : index
    %c0_18 = arith.constant 0 : index
    %38 = vector.load %arg20[%c0_17, %c0_18] : memref<16x256xf32, #tpu.memory_space<vmem>>, vector<16x128xf32>
    %39 = arith.truncf %37 : vector<32x128xf32> to vector<32x128xbf16>
    %cst_19 = arith.constant dense<0.000000e+00> : vector<16x128xf32>
    %40 = tpu.matmul %10, %39, %cst_19 {dimension_numbers = #tpu.dot_dimension_numbers<[0], [0], [1], [1], [0, 1, 1, 1], [], []>} : vector<32x16xbf16>, vector<32x128xbf16>, vector<16x128xf32> -> vector<16x128xf32>
    %41 = arith.addf %38, %40 : vector<16x128xf32>
    %c0_20 = arith.constant 0 : index
    %c0_21 = arith.constant 0 : index
    %42 = vector.load %arg20[%c0_20, %c0_21] : memref<16x256xf32, #tpu.memory_space<vmem>>, vector<16x128xf32>
    tpu.vector_store %arg20[%c0_20, %c0_21], %41 {strides = array<i32>} : memref<16x256xf32, #tpu.memory_space<vmem>>, vector<16x128xf32>,
    %c0_22 = arith.constant 0 : index
    %c128_23 = arith.constant 128 : index
    %43 = vector.load %arg20[%c0_22, %c128_23] : memref<16x256xf32, #tpu.memory_space<vmem>>, vector<16x128xf32>
    %44 = arith.truncf %36 : vector<32x128xf32> to vector<32x128xbf16>
    %cst_24 = arith.constant dense<0.000000e+00> : vector<16x128xf32>
    %45 = tpu.matmul %10, %44, %cst_24 {dimension_numbers = #tpu.dot_dimension_numbers<[0], [0], [1], [1], [0, 1, 1, 1], [], []>} : vector<32x16xbf16>, vector<32x128xbf16>, vector<16x128xf32> -> vector<16x128xf32>
    %46 = arith.addf %43, %45 : vector<16x128xf32>
    %c0_25 = arith.constant 0 : index
    %c128_26 = arith.constant 128 : index
    %47 = vector.load %arg20[%c0_25, %c128_26] : memref<16x256xf32, #tpu.memory_space<vmem>>, vector<16x128xf32>
    tpu.vector_store %arg20[%c0_25, %c128_26], %46 {strides = array<i32>} : memref<16x256xf32, #tpu.memory_space<vmem>>, vector<16x128xf32>,
    %48 = arith.truncf %30 : vector<32x128xf32> to vector<32x128xbf16>
    %c0_27 = arith.constant 0 : index
    %c0_28 = arith.constant 0 : index
    %49 = vector.load %arg16[%c0_27, %c0_28] : memref<32x128xbf16, #tpu.memory_space<vmem>>, vector<32x128xbf16>
    tpu.vector_store %arg16[%c0_27, %c0_28], %48 {strides = array<i32>} : memref<32x128xbf16, #tpu.memory_space<vmem>>, vector<32x128xbf16>,
    %c1_i32_29 = arith.constant 1 : i32
    %50 = arith.cmpi slt, %arg0, %c1_i32_29 : i32
    %51 = arith.extui %50 : i1 to i32
    %c0_i32_30 = arith.constant 0 : i32
    %52 = arith.cmpi ne, %51, %c0_i32_30 : i32
    scf.if %52 {
      %c0_32 = arith.constant 0 : index
      %c0_33 = arith.constant 0 : index
      %55 = vector.load %arg21[%c0_32, %c0_33] : memref<1x128xf32, #tpu.memory_space<vmem>>, vector<1x128xf32>
      %cst_34 = arith.constant dense<0.000000e+00> : vector<128xf32>
      %56 = vector.multi_reduction <add>, %30, %cst_34 [0] : vector<32x128xf32> to vector<128xf32>
      %57 = vector.shape_cast %56 : vector<128xf32> to vector<1x128xf32>
      %58 = arith.addf %55, %57 : vector<1x128xf32>
      %c0_35 = arith.constant 0 : index
      %c0_36 = arith.constant 0 : index
      %59 = vector.load %arg21[%c0_35, %c0_36] : memref<1x128xf32, #tpu.memory_space<vmem>>, vector<1x128xf32>
      tpu.vector_store %arg21[%c0_35, %c0_36], %58 {strides = array<i32>} : memref<1x128xf32, #tpu.memory_space<vmem>>, vector<1x128xf32>,
      %c0_37 = arith.constant 0 : index
      %c0_38 = arith.constant 0 : index
      %60 = vector.load %arg22[%c0_37, %c0_38] : memref<1x128xf32, #tpu.memory_space<vmem>>, vector<1x128xf32>
      %61 = arith.mulf %30, %30 : vector<32x128xf32>
      %cst_39 = arith.constant dense<0.000000e+00> : vector<128xf32>
      %62 = vector.multi_reduction <add>, %61, %cst_39 [0] : vector<32x128xf32> to vector<128xf32>
      %63 = vector.shape_cast %62 : vector<128xf32> to vector<1x128xf32>
      %64 = arith.addf %60, %63 : vector<1x128xf32>
      %c0_40 = arith.constant 0 : index
      %c0_41 = arith.constant 0 : index
      %65 = vector.load %arg22[%c0_40, %c0_41] : memref<1x128xf32, #tpu.memory_space<vmem>>, vector<1x128xf32>
      tpu.vector_store %arg22[%c0_40, %c0_41], %64 {strides = array<i32>} : memref<1x128xf32, #tpu.memory_space<vmem>>, vector<1x128xf32>,
    } else {
    }
    %53 = arith.extui %0 : i1 to i32
    %c0_i32_31 = arith.constant 0 : i32
    %54 = arith.cmpi ne, %53, %c0_i32_31 : i32
    scf.if %54 {
      %55 = tpu.iota {dimensions = array<i32: 0>} : vector<32x1xi32>
      %c32_i32 = arith.constant 32 : i32
      %56 = arith.muli %arg0, %c32_i32 : i32
      %57 = vector.broadcast %56 : i32 to vector<32x1xi32>
      %58 = arith.addi %55, %57 : vector<32x1xi32>
      %c64_i32 = arith.constant 64 : i32
      %59 = vector.broadcast %c64_i32 : i32 to vector<32x1xi32>
      %60 = arith.cmpi slt, %58, %59 : vector<32x1xi32>
      %61 = arith.extui %60 : vector<32x1xi1> to vector<32x1xi32>
      %62 = arith.sitofp %61 : vector<32x1xi32> to vector<32x1xf32>
      %c0_32 = arith.constant 0 : index
      %c0_33 = arith.constant 0 : index
      %63 = vector.load %arg21[%c0_32, %c0_33] : memref<1x128xf32, #tpu.memory_space<vmem>>, vector<1x128xf32>
      %64 = vector.broadcast %62 : vector<32x1xf32> to vector<32x128xf32>
      %65 = arith.mulf %30, %64 : vector<32x128xf32>
      %cst_34 = arith.constant dense<0.000000e+00> : vector<128xf32>
      %66 = vector.multi_reduction <add>, %65, %cst_34 [0] : vector<32x128xf32> to vector<128xf32>
      %67 = vector.shape_cast %66 : vector<128xf32> to vector<1x128xf32>
      %68 = arith.addf %63, %67 : vector<1x128xf32>
      %c0_35 = arith.constant 0 : index
      %c0_36 = arith.constant 0 : index
      %69 = vector.load %arg21[%c0_35, %c0_36] : memref<1x128xf32, #tpu.memory_space<vmem>>, vector<1x128xf32>
      tpu.vector_store %arg21[%c0_35, %c0_36], %68 {strides = array<i32>} : memref<1x128xf32, #tpu.memory_space<vmem>>, vector<1x128xf32>,
      %c0_37 = arith.constant 0 : index
      %c0_38 = arith.constant 0 : index
      %70 = vector.load %arg22[%c0_37, %c0_38] : memref<1x128xf32, #tpu.memory_space<vmem>>, vector<1x128xf32>
      %71 = arith.mulf %30, %30 : vector<32x128xf32>
      %72 = vector.broadcast %62 : vector<32x1xf32> to vector<32x128xf32>
      %73 = arith.mulf %71, %72 : vector<32x128xf32>
      %cst_39 = arith.constant dense<0.000000e+00> : vector<128xf32>
      %74 = vector.multi_reduction <add>, %73, %cst_39 [0] : vector<32x128xf32> to vector<128xf32>
      %75 = vector.shape_cast %74 : vector<128xf32> to vector<1x128xf32>
      %76 = arith.addf %70, %75 : vector<1x128xf32>
      %c0_40 = arith.constant 0 : index
      %c0_41 = arith.constant 0 : index
      %77 = vector.load %arg22[%c0_40, %c0_41] : memref<1x128xf32, #tpu.memory_space<vmem>>, vector<1x128xf32>
      tpu.vector_store %arg22[%c0_40, %c0_41], %76 {strides = array<i32>} : memref<1x128xf32, #tpu.memory_space<vmem>>, vector<1x128xf32>,
      %c0_42 = arith.constant 0 : index
      %c0_43 = arith.constant 0 : index
      %78 = vector.load %arg20[%c0_42, %c0_43] : memref<16x256xf32, #tpu.memory_space<vmem>>, vector<16x128xf32>
      %c0_44 = arith.constant 0 : index
      %c128_45 = arith.constant 128 : index
      %79 = vector.load %arg20[%c0_44, %c128_45] : memref<16x256xf32, #tpu.memory_space<vmem>>, vector<16x128xf32>
      %cst_46 = arith.constant 9.99999997E-7 : f32
      %80 = vector.broadcast %cst_46 : f32 to vector<16x128xf32>
      %81 = arith.addf %79, %80 : vector<16x128xf32>
      %82 = arith.divf %78, %81 : vector<16x128xf32>
      %c0_47 = arith.constant 0 : index
      %c0_48 = arith.constant 0 : index
      %83 = vector.load %arg1[%c0_47, %c0_48] : memref<16x128xf32, #tpu.memory_space<vmem>>, vector<16x128xf32>
      %c0_49 = arith.constant 0 : index
      %c0_50 = arith.constant 0 : index
      %84 = vector.load %arg9[%c0_49, %c0_50] : memref<128x128xf32, #tpu.memory_space<vmem>>, vector<128x128xf32>
      %cst_51 = arith.constant dense<0.000000e+00> : vector<16x128xf32>
      %85 = tpu.matmul %83, %84, %cst_51 {dimension_numbers = #tpu.dot_dimension_numbers<[1], [0], [0], [1], [0, 0, 1, 1], [], []>} : vector<16x128xf32>, vector<128x128xf32>, vector<16x128xf32> -> vector<16x128xf32>
      %c0_52 = arith.constant 0 : index
      %c0_53 = arith.constant 0 : index
      %86 = vector.load %arg10[%c0_52, %c0_53] : memref<1x128xf32, #tpu.memory_space<vmem>>, vector<1x128xf32>
      %87 = vector.broadcast %86 : vector<1x128xf32> to vector<16x128xf32>
      %88 = arith.addf %85, %87 : vector<16x128xf32>
      %89 = arith.addf %88, %82 : vector<16x128xf32>
      %cst_54 = arith.constant dense<0.000000e+00> : vector<128xf32>
      %90 = vector.multi_reduction <add>, %89, %cst_54 [0] : vector<16x128xf32> to vector<128xf32>
      %91 = vector.shape_cast %90 : vector<128xf32> to vector<1x128xf32>
      %cst_55 = arith.constant 1.600000e+01 : f32
      %92 = vector.broadcast %cst_55 : f32 to vector<1x128xf32>
      %93 = arith.divf %91, %92 : vector<1x128xf32>
      %94 = vector.broadcast %93 : vector<1x128xf32> to vector<16x128xf32>
      %95 = arith.subf %89, %94 : vector<16x128xf32>
      %96 = vector.broadcast %93 : vector<1x128xf32> to vector<16x128xf32>
      %97 = arith.subf %89, %96 : vector<16x128xf32>
      %98 = arith.mulf %95, %97 : vector<16x128xf32>
      %cst_56 = arith.constant dense<0.000000e+00> : vector<128xf32>
      %99 = vector.multi_reduction <add>, %98, %cst_56 [0] : vector<16x128xf32> to vector<128xf32>
      %100 = vector.shape_cast %99 : vector<128xf32> to vector<1x128xf32>
      %cst_57 = arith.constant 1.600000e+01 : f32
      %101 = vector.broadcast %cst_57 : f32 to vector<1x128xf32>
      %102 = arith.divf %100, %101 : vector<1x128xf32>
      %c0_58 = arith.constant 0 : index
      %c0_59 = arith.constant 0 : index
      %103 = vector.load %arg11[%c0_58, %c0_59] : memref<1x128xf32, #tpu.memory_space<vmem>>, vector<1x128xf32>
      %104 = vector.broadcast %93 : vector<1x128xf32> to vector<16x128xf32>
      %105 = arith.subf %89, %104 : vector<16x128xf32>
      %106 = vector.broadcast %103 : vector<1x128xf32> to vector<16x128xf32>
      %107 = arith.mulf %106, %105 : vector<16x128xf32>
      %cst_60 = arith.constant 9.99999974E-6 : f32
      %108 = vector.broadcast %cst_60 : f32 to vector<1x128xf32>
      %109 = arith.addf %102, %108 : vector<1x128xf32>
      %110 = math.rsqrt %109 : vector<1x128xf32>
      %111 = vector.broadcast %110 : vector<1x128xf32> to vector<16x128xf32>
      %112 = arith.mulf %107, %111 : vector<16x128xf32>
      %c0_61 = arith.constant 0 : index
      %c0_62 = arith.constant 0 : index
      %113 = vector.load %arg12[%c0_61, %c0_62] : memref<1x128xf32, #tpu.memory_space<vmem>>, vector<1x128xf32>
      %114 = vector.broadcast %113 : vector<1x128xf32> to vector<16x128xf32>
      %115 = arith.addf %112, %114 : vector<16x128xf32>
      %c0_63 = arith.constant 0 : index
      %c0_64 = arith.constant 0 : index
      %116 = vector.load %arg1[%c0_63, %c0_64] : memref<16x128xf32, #tpu.memory_space<vmem>>, vector<16x128xf32>
      %cst_65 = arith.constant 0.000000e+00 : f32
      %117 = vector.broadcast %cst_65 : f32 to vector<16x128xf32>
      %118 = arith.subf %117, %115 : vector<16x128xf32>
      %119 = math.exp %118 : vector<16x128xf32>
      %cst_66 = arith.constant 1.000000e+00 : f32
      %120 = vector.broadcast %cst_66 : f32 to vector<16x128xf32>
      %121 = arith.addf %120, %119 : vector<16x128xf32>
      %122 = tpu.reciprocal %121 {approx = true} : vector<16x128xf32> -> vector<16x128xf32>
      %123 = arith.mulf %115, %122 : vector<16x128xf32>
      %124 = arith.addf %116, %123 : vector<16x128xf32>
      %c0_67 = arith.constant 0 : index
      %c0_68 = arith.constant 0 : index
      %125 = vector.load %arg15[%c0_67, %c0_68] : memref<16x128xf32, #tpu.memory_space<vmem>>, vector<16x128xf32>
      tpu.vector_store %arg15[%c0_67, %c0_68], %124 {strides = array<i32>} : memref<16x128xf32, #tpu.memory_space<vmem>>, vector<16x128xf32>,
      %c0_69 = arith.constant 0 : index
      %c0_70 = arith.constant 0 : index
      %126 = vector.load %arg21[%c0_69, %c0_70] : memref<1x128xf32, #tpu.memory_space<vmem>>, vector<1x128xf32>
      %cst_71 = arith.constant 1.562500e-02 : f32
      %127 = vector.broadcast %cst_71 : f32 to vector<1x128xf32>
      %128 = arith.mulf %126, %127 : vector<1x128xf32>
      %c0_72 = arith.constant 0 : index
      %c0_73 = arith.constant 0 : index
      %129 = vector.load %arg22[%c0_72, %c0_73] : memref<1x128xf32, #tpu.memory_space<vmem>>, vector<1x128xf32>
      %cst_74 = arith.constant 1.562500e-02 : f32
      %130 = vector.broadcast %cst_74 : f32 to vector<1x128xf32>
      %131 = arith.mulf %129, %130 : vector<1x128xf32>
      %132 = arith.mulf %128, %128 : vector<1x128xf32>
      %133 = arith.subf %131, %132 : vector<1x128xf32>
      %cst_75 = arith.constant 0.000000e+00 : f32
      %134 = vector.broadcast %cst_75 : f32 to vector<1x128xf32>
      %135 = arith.maximumf %133, %134 : vector<1x128xf32>
      %c0_76 = arith.constant 0 : index
      %c0_77 = arith.constant 0 : index
      %136 = vector.load %arg13[%c0_76, %c0_77] : memref<1x128xf32, #tpu.memory_space<vmem>>, vector<1x128xf32>
      %cst_78 = arith.constant 9.99999974E-6 : f32
      %137 = vector.broadcast %cst_78 : f32 to vector<1x128xf32>
      %138 = arith.addf %135, %137 : vector<1x128xf32>
      %139 = math.rsqrt %138 : vector<1x128xf32>
      %140 = arith.mulf %136, %139 : vector<1x128xf32>
      %c0_79 = arith.constant 0 : index
      %c0_80 = arith.constant 0 : index
      %141 = vector.load %arg17[%c0_79, %c0_80] : memref<1x128xf32, #tpu.memory_space<vmem>>, vector<1x128xf32>
      tpu.vector_store %arg17[%c0_79, %c0_80], %140 {strides = array<i32>} : memref<1x128xf32, #tpu.memory_space<vmem>>, vector<1x128xf32>,
      %c0_81 = arith.constant 0 : index
      %c0_82 = arith.constant 0 : index
      %142 = vector.load %arg14[%c0_81, %c0_82] : memref<1x128xf32, #tpu.memory_space<vmem>>, vector<1x128xf32>
      %143 = arith.mulf %128, %140 : vector<1x128xf32>
      %144 = arith.subf %142, %143 : vector<1x128xf32>
      %c0_83 = arith.constant 0 : index
      %c0_84 = arith.constant 0 : index
      %145 = vector.load %arg18[%c0_83, %c0_84] : memref<1x128xf32, #tpu.memory_space<vmem>>, vector<1x128xf32>
      tpu.vector_store %arg18[%c0_83, %c0_84], %144 {strides = array<i32>} : memref<1x128xf32, #tpu.memory_space<vmem>>, vector<1x128xf32>,
    } else {
    }
    return
  }
  func.func @transform_0(%arg0: i32) -> (i32, i32) {
    %c0_i32 = arith.constant 0 : i32
    %c0_i32_0 = arith.constant 0 : i32
    %c0_i32_1 = arith.constant 0 : i32
    return %c0_i32, %c0_i32_0 : i32, i32
  }
  func.func @transform_1(%arg0: i32) -> (i32, i32) {
    %c0_i32 = arith.constant 0 : i32
    %c0_i32_0 = arith.constant 0 : i32
    return %arg0, %c0_i32 : i32, i32
  }
  func.func @transform_2(%arg0: i32) -> (i32, i32) {
    %c0_i32 = arith.constant 0 : i32
    %c0_i32_0 = arith.constant 0 : i32
    return %arg0, %c0_i32 : i32, i32
  }
  func.func @transform_3(%arg0: i32) -> (i32, i32) {
    %c0_i32 = arith.constant 0 : i32
    %c0_i32_0 = arith.constant 0 : i32
    return %arg0, %c0_i32 : i32, i32
  }
  func.func @transform_4(%arg0: i32) -> (i32, i32) {
    %c0_i32 = arith.constant 0 : i32
    %c0_i32_0 = arith.constant 0 : i32
    %c0_i32_1 = arith.constant 0 : i32
    return %c0_i32, %c0_i32_0 : i32, i32
  }
  func.func @transform_5(%arg0: i32) -> (i32, i32) {
    %c0_i32 = arith.constant 0 : i32
    %c0_i32_0 = arith.constant 0 : i32
    %c0_i32_1 = arith.constant 0 : i32
    return %c0_i32, %c0_i32_0 : i32, i32
  }
  func.func @transform_6(%arg0: i32) -> (i32, i32) {
    %c0_i32 = arith.constant 0 : i32
    %c0_i32_0 = arith.constant 0 : i32
    %c0_i32_1 = arith.constant 0 : i32
    return %c0_i32, %c0_i32_0 : i32, i32
  }
  func.func @transform_7(%arg0: i32) -> (i32, i32) {
    %c0_i32 = arith.constant 0 : i32
    %c0_i32_0 = arith.constant 0 : i32
    %c0_i32_1 = arith.constant 0 : i32
    return %c0_i32, %c0_i32_0 : i32, i32
  }
  func.func @transform_8(%arg0: i32) -> (i32, i32) {
    %c0_i32 = arith.constant 0 : i32
    %c0_i32_0 = arith.constant 0 : i32
    %c0_i32_1 = arith.constant 0 : i32
    return %c0_i32, %c0_i32_0 : i32, i32
  }
  func.func @transform_9(%arg0: i32) -> (i32, i32) {
    %c0_i32 = arith.constant 0 : i32
    %c0_i32_0 = arith.constant 0 : i32
    %c0_i32_1 = arith.constant 0 : i32
    return %c0_i32, %c0_i32_0 : i32, i32
  }
  func.func @transform_10(%arg0: i32) -> (i32, i32) {
    %c0_i32 = arith.constant 0 : i32
    %c0_i32_0 = arith.constant 0 : i32
    %c0_i32_1 = arith.constant 0 : i32
    return %c0_i32, %c0_i32_0 : i32, i32
  }
  func.func @transform_11(%arg0: i32) -> (i32, i32) {
    %c0_i32 = arith.constant 0 : i32
    %c0_i32_0 = arith.constant 0 : i32
    %c0_i32_1 = arith.constant 0 : i32
    return %c0_i32, %c0_i32_0 : i32, i32
  }
  func.func @transform_12(%arg0: i32) -> (i32, i32) {
    %c0_i32 = arith.constant 0 : i32
    %c0_i32_0 = arith.constant 0 : i32
    %c0_i32_1 = arith.constant 0 : i32
    return %c0_i32, %c0_i32_0 : i32, i32
  }
  func.func @transform_13(%arg0: i32) -> (i32, i32) {
    %c0_i32 = arith.constant 0 : i32
    %c0_i32_0 = arith.constant 0 : i32
    %c0_i32_1 = arith.constant 0 : i32
    return %c0_i32, %c0_i32_0 : i32, i32
  }
  func.func @transform_14(%arg0: i32) -> (i32, i32) {
    %c0_i32 = arith.constant 0 : i32
    %c0_i32_0 = arith.constant 0 : i32
    %c0_i32_1 = arith.constant 0 : i32
    return %c0_i32, %c0_i32_0 : i32, i32
  }
  func.func @transform_15(%arg0: i32) -> (i32, i32) {
    %c0_i32 = arith.constant 0 : i32
    %c0_i32_0 = arith.constant 0 : i32
    return %arg0, %c0_i32 : i32, i32
  }
  func.func @transform_16(%arg0: i32) -> (i32, i32) {
    %c0_i32 = arith.constant 0 : i32
    %c0_i32_0 = arith.constant 0 : i32
    %c0_i32_1 = arith.constant 0 : i32
    return %c0_i32, %c0_i32_0 : i32, i32
  }
  func.func @transform_17(%arg0: i32) -> (i32, i32) {
    %c0_i32 = arith.constant 0 : i32
    %c0_i32_0 = arith.constant 0 : i32
    %c0_i32_1 = arith.constant 0 : i32
    return %c0_i32, %c0_i32_0 : i32, i32
  }
}

</mosaic_0001>

<llo_original>
// kernel: tpu_custom_call.1
$region0: #{tpu_custom_call.1}
  #allocation0 [shape = 'u32[]', space=smem, size = 0x4, offset = 0x4, fixed_abs, tag = 'smem constant byte address 0x4 - core index']
  #allocation1 [shape = 'u32[144,128]{1,0:T(1,128)}', space=vmem, size = 0x12000, scoped, tag = 'internal scratch']
  #allocation2 [shape = 'bf16[16,384]{1,0:T(16,128)(2,1)}', space=vmem, size = 0x3000, scoped, tag = 'scratch operand']
  #allocation3 [shape = 'f32[16,256]{1,0:T(8,128)}', space=vmem, size = 0x4000, scoped, tag = 'scratch operand']
  #allocation4 [shape = 'f32[1,128]{1,0:T(1,128)}', space=vmem, size = 0x200, scoped, tag = 'scratch operand']
  #allocation5 [shape = 'f32[1,128]{1,0:T(1,128)}', space=vmem, size = 0x200, scoped, tag = 'scratch operand']
  %s0 = inlined_call_operand.vmem [shape: f32[16,128], index: 0, kind: input, shape index: {}]
  %s1 = inlined_call_operand.hbm [shape: f32[64,128], index: 1, kind: input, shape index: {}]
  %s2 = inlined_call_operand.vmem [shape: s32[64,1], index: 2, kind: input, shape index: {}]
  %s3 = inlined_call_operand.vmem [shape: s32[64,1], index: 3, kind: input, shape index: {}]
  %s4 = inlined_call_operand.hbm [shape: f32[128,384], index: 4, kind: input, shape index: {}]
  %s5 = inlined_call_operand.vmem [shape: f32[1,384], index: 5, kind: input, shape index: {}]
  %s6 = inlined_call_operand.vmem [shape: f32[128,128], index: 6, kind: input, shape index: {}]
  %s7 = inlined_call_operand.vmem [shape: f32[1,128], index: 7, kind: input, shape index: {}]
  %s8 = inlined_call_operand.hbm [shape: f32[128,128], index: 8, kind: input, shape index: {}]
  %s9 = inlined_call_operand.vmem [shape: f32[1,128], index: 9, kind: input, shape index: {}]
  %s10 = inlined_call_operand.vmem [shape: f32[1,128], index: 10, kind: input, shape index: {}]
  %s11 = inlined_call_operand.vmem [shape: f32[1,128], index: 11, kind: input, shape index: {}]
  %s12 = inlined_call_operand.vmem [shape: f32[1,128], index: 12, kind: input, shape index: {}]
  %s13 = inlined_call_operand.vmem [shape: f32[1,128], index: 13, kind: input, shape index: {}]
  %s14 = inlined_call_operand.hbm [shape: f32[16,128], index: 14, kind: output, shape index: {0}]
  %s15 = inlined_call_operand.hbm [shape: bf16[64,128], index: 15, kind: output, shape index: {1}]
  %s16 = inlined_call_operand.hbm [shape: f32[1,128], index: 16, kind: output, shape index: {2}]
  %s17 = inlined_call_operand.hbm [shape: f32[1,128], index: 17, kind: output, shape index: {3}]
  %18 = xla_tuple %s14, %s15, %s16, %s17
  %s19 = sld [smem:[#allocation0]]
  $region137: #{tpu_custom_call.1} parent=0
    _
  %s21 = ssub.s32 1, %s19
  %s22 = scalar_select 0, %s21, %s19
  $region1: #{tpu_custom_call.1} parent=0
    #allocation6 [shape = 'u8[32768]{0}', space=vmem, size = 0x8000, scoped, tag = 'input window, operand 1']
    #allocation7 [shape = 's32[2]{0}', space=sflag, size = 0x8, scoped, tag = 'scoped memory for tpu_custom_call.1']
    #allocation8 [shape = 's32[2]{0}', space=sflag, size = 0x8, scoped, tag = 'scoped memory for tpu_custom_call.1']
    #allocation9 [shape = 'u8[196608]{0}', space=vmem, size = 0x30000, scoped, tag = 'input window, operand 4, single buffered']
    #allocation10 [shape = 's32[1]{0}', space=sflag, size = 0x4, scoped, tag = 'scoped memory for tpu_custom_call.1']
    #allocation11 [shape = 'u8[65536]{0}', space=vmem, size = 0x10000, scoped, tag = 'input window, operand 8, single buffered']
    #allocation12 [shape = 'u8[8192]{0}', space=vmem, size = 0x2000, scoped, tag = 'output window, operand 0, single buffered']
    #allocation13 [shape = 'u8[16384]{0}', space=vmem, size = 0x4000, scoped, tag = 'output window, operand 1']
    #allocation14 [shape = 's32[2]{0}', space=sflag, size = 0x8, scoped, tag = 'scoped memory for tpu_custom_call.1']
    #allocation15 [shape = 'u8[512]{0}', space=vmem, size = 0x400, scoped, tag = 'output window, operand 2, single buffered']
    #allocation16 [shape = 'u8[512]{0}', space=vmem, size = 0x400, scoped, tag = 'output window, operand 3, single buffered']
    #allocation17 [shape = 's32[1]{0}', space=sflag, size = 0x4, scoped, tag = 'scoped memory for tpu_custom_call.1']
    %23 = vsyncpa [#allocation7], 0
    %s24 = scalar_lea.sflag [#allocation7], 1
    %25 = vsyncpa %s24, 0
    %26 = vsyncpa [#allocation10], 0
    %27 = vsyncpa [#allocation8], 0
    %28 = vsyncpa [#allocation14], 0
    %s29 = scalar_lea.sflag [#allocation14], 1
    %30 = vsyncpa %s29, 0
    %31 = vsyncpa [#allocation17], 0
    loop: start=0, step=1, limit=4
    $region2: #{tpu_custom_call.1} parent=1 // loop_pre_header
      _
    $region3: #{tpu_custom_call.1} parent=1 // loop_header
      %s33 = sphi 0, %s37
      %p34 = scmp.ge.s32.totalorder %s33, 4
      %s41 = sphi 0, %s41
      %s43 = sphi 0, %s41
      %s44 = sphi 0, %s43
      %s58 = sphi 0, %s44
      %s64 = sphi 0, %s66
      %s67 = sphi 0, %s64
      %s68 = sphi 0, %s67
      %s84 = sphi 0, %s68
      %s90 = sphi 0, %s92
      %s93 = sphi 0, %s90
      %s94 = sphi 0, %s93
      %s110 = sphi 0, %s94
      %s116 = sphi 0, %s118
      %s119 = sphi 0, %s116
      %s120 = sphi 0, %s119
      %s136 = sphi 0, %s120
      %s140 = sphi 0, %s140
      %s142 = sphi 0, %s140
      %s143 = sphi 0, %s142
      %s157 = sphi 0, %s143
      %s161 = sphi 0, %s161
      %s163 = sphi 0, %s161
      %s164 = sphi 0, %s163
      %s178 = sphi 0, %s164
      %s182 = sphi 0, %s182
      %s184 = sphi 0, %s182
      %s185 = sphi 0, %s184
      %s199 = sphi 0, %s185
      %s203 = sphi 0, %s203
      %s205 = sphi 0, %s203
      %s206 = sphi 0, %s205
      %s220 = sphi 0, %s206
      %s224 = sphi 0, %s224
      %s226 = sphi 0, %s224
      %s227 = sphi 0, %s226
      %s241 = sphi 0, %s227
      %s245 = sphi 0, %s245
      %s247 = sphi 0, %s245
      %s248 = sphi 0, %s247
      %s262 = sphi 0, %s248
      %s266 = sphi 0, %s266
      %s268 = sphi 0, %s266
      %s269 = sphi 0, %s268
      %s283 = sphi 0, %s269
      %s287 = sphi 0, %s287
      %s289 = sphi 0, %s287
      %s290 = sphi 0, %s289
      %s304 = sphi 0, %s290
      %s308 = sphi 0, %s308
      %s310 = sphi 0, %s308
      %s311 = sphi 0, %s310
      %s325 = sphi 0, %s311
      %s329 = sphi 0, %s329
      %s331 = sphi 0, %s329
      %s332 = sphi 0, %s331
      %s346 = sphi 0, %s332
      %s350 = sphi 0, %s350
      %s352 = sphi 0, %s350
      %s353 = sphi 0, %s352
      %s367 = sphi 0, %s353
      %s373 = sphi 0, %s375
      %s376 = sphi 0, %s373
      %s377 = sphi 0, %s376
      %s393 = sphi 0, %s377
      %s397 = sphi 0, %s397
      %s399 = sphi 0, %s397
      %s400 = sphi 0, %s399
      %s414 = sphi 0, %s400
      %s418 = sphi 0, %s418
      %s420 = sphi 0, %s418
      %s421 = sphi 0, %s420
      %s435 = sphi 0, %s421
    $region4: #{tpu_custom_call.1} parent=1 // loop_header_branch
      %36 = sbr.rel (%p34) target = $region8
    $region5: #{tpu_custom_call.1} parent=1 // loop_body
      %s38 = ssub.s32 %s33, 1
      %s39 = ssub.s32 %s33, 2
      %s40 = sadd.s32 %s33, 1
      %s42 = sadd.s32 %s41, 1
      %p45 = scmp.eq.s32.totalorder %s33, 1
      %p46 = scmp.ne.s32.totalorder %s41, %s43
      %p47 = scmp.eq.s32.totalorder %s33, 0
      %p48 = por %p46, %p47
      %p49 = scmp.ne.s32.totalorder %s41, %s43
      %p50 = scmp.eq.s32.totalorder %s38, 1
      %p51 = por %p49, %p50
      %p52 = scmp.ne.s32.totalorder %s43, %s44
      %p53 = scmp.eq.s32.totalorder %s38, 0
      %p54 = por %p52, %p53
      %p55 = scmp.ne.s32.totalorder %s43, %s44
      %p56 = scmp.eq.s32.totalorder %s39, 1
      %p57 = por %p55, %p56
      %p59 = scmp.ne.s32.totalorder %s44, %s58
      %p60 = scmp.eq.s32.totalorder %s39, 0
      %p61 = por %p59, %p60
      %s62 = ssub.s32 %s33, %s40
      %p63 = scmp.eq.s32.totalorder %s62, 0
      %s65 = sadd.s32 %s64, 1
      %s66 = scalar_select %p63, %s64, %s65
      %p69 = pneg %p63
      %p70 = scmp.eq.s32.totalorder %s33, 1
      %p71 = por %p69, %p70
      %p72 = scmp.ne.s32.totalorder %s64, %s67
      %p73 = scmp.eq.s32.totalorder %s33, 0
      %p74 = por %p72, %p73
      %p75 = scmp.ne.s32.totalorder %s64, %s67
      %p76 = scmp.eq.s32.totalorder %s38, 1
      %p77 = por %p75, %p76
      %p78 = scmp.ne.s32.totalorder %s67, %s68
      %p79 = scmp.eq.s32.totalorder %s38, 0
      %p80 = por %p78, %p79
      %p81 = scmp.ne.s32.totalorder %s67, %s68
      %p82 = scmp.eq.s32.totalorder %s39, 1
      %p83 = por %p81, %p82
      %p85 = scmp.ne.s32.totalorder %s68, %s84
      %p86 = scmp.eq.s32.totalorder %s39, 0
      %p87 = por %p85, %p86
      %s88 = ssub.s32 %s33, %s40
      %p89 = scmp.eq.s32.totalorder %s88, 0
      %s91 = sadd.s32 %s90, 1
      %s92 = scalar_select %p89, %s90, %s91
      %p95 = pneg %p89
      %p96 = scmp.eq.s32.totalorder %s33, 1
      %p97 = por %p95, %p96
      %p98 = scmp.ne.s32.totalorder %s90, %s93
      %p99 = scmp.eq.s32.totalorder %s33, 0
      %p100 = por %p98, %p99
      %p101 = scmp.ne.s32.totalorder %s90, %s93
      %p102 = scmp.eq.s32.totalorder %s38, 1
      %p103 = por %p101, %p102
      %p104 = scmp.ne.s32.totalorder %s93, %s94
      %p105 = scmp.eq.s32.totalorder %s38, 0
      %p106 = por %p104, %p105
      %p107 = scmp.ne.s32.totalorder %s93, %s94
      %p108 = scmp.eq.s32.totalorder %s39, 1
      %p109 = por %p107, %p108
      %p111 = scmp.ne.s32.totalorder %s94, %s110
      %p112 = scmp.eq.s32.totalorder %s39, 0
      %p113 = por %p111, %p112
      %s114 = ssub.s32 %s33, %s40
      %p115 = scmp.eq.s32.totalorder %s114, 0
      %s117 = sadd.s32 %s116, 1
      %s118 = scalar_select %p115, %s116, %s117
      %p121 = pneg %p115
      %p122 = scmp.eq.s32.totalorder %s33, 1
      %p123 = por %p121, %p122
      %p124 = scmp.ne.s32.totalorder %s116, %s119
      %p125 = scmp.eq.s32.totalorder %s33, 0
      %p126 = por %p124, %p125
      %p127 = scmp.ne.s32.totalorder %s116, %s119
      %p128 = scmp.eq.s32.totalorder %s38, 1
      %p129 = por %p127, %p128
      %p130 = scmp.ne.s32.totalorder %s119, %s120
      %p131 = scmp.eq.s32.totalorder %s38, 0
      %p132 = por %p130, %p131
      %p133 = scmp.ne.s32.totalorder %s119, %s120
      %p134 = scmp.eq.s32.totalorder %s39, 1
      %p135 = por %p133, %p134
      %p137 = scmp.ne.s32.totalorder %s120, %s136
      %p138 = scmp.eq.s32.totalorder %s39, 0
      %p139 = por %p137, %p138
      %s141 = sadd.s32 %s140, 1
      %p144 = scmp.eq.s32.totalorder %s33, 1
      %p145 = scmp.ne.s32.totalorder %s140, %s142
      %p146 = scmp.eq.s32.totalorder %s33, 0
      %p147 = por %p145, %p146
      %p148 = scmp.ne.s32.totalorder %s140, %s142
      %p149 = scmp.eq.s32.totalorder %s38, 1
      %p150 = por %p148, %p149
      %p151 = scmp.ne.s32.totalorder %s142, %s143
      %p152 = scmp.eq.s32.totalorder %s38, 0
      %p153 = por %p151, %p152
      %p154 = scmp.ne.s32.totalorder %s142, %s143
      %p155 = scmp.eq.s32.totalorder %s39, 1
      %p156 = por %p154, %p155
      %p158 = scmp.ne.s32.totalorder %s143, %s157
      %p159 = scmp.eq.s32.totalorder %s39, 0
      %p160 = por %p158, %p159
      %s162 = sadd.s32 %s161, 1
      %p165 = scmp.eq.s32.totalorder %s33, 1
      %p166 = scmp.ne.s32.totalorder %s161, %s163
      %p167 = scmp.eq.s32.totalorder %s33, 0
      %p168 = por %p166, %p167
      %p169 = scmp.ne.s32.totalorder %s161, %s163
      %p170 = scmp.eq.s32.totalorder %s38, 1
      %p171 = por %p169, %p170
      %p172 = scmp.ne.s32.totalorder %s163, %s164
      %p173 = scmp.eq.s32.totalorder %s38, 0
      %p174 = por %p172, %p173
      %p175 = scmp.ne.s32.totalorder %s163, %s164
      %p176 = scmp.eq.s32.totalorder %s39, 1
      %p177 = por %p175, %p176
      %p179 = scmp.ne.s32.totalorder %s164, %s178
      %p180 = scmp.eq.s32.totalorder %s39, 0
      %p181 = por %p179, %p180
      %s183 = sadd.s32 %s182, 1
      %p186 = scmp.eq.s32.totalorder %s33, 1
      %p187 = scmp.ne.s32.totalorder %s182, %s184
      %p188 = scmp.eq.s32.totalorder %s33, 0
      %p189 = por %p187, %p188
      %p190 = scmp.ne.s32.totalorder %s182, %s184
      %p191 = scmp.eq.s32.totalorder %s38, 1
      %p192 = por %p190, %p191
      %p193 = scmp.ne.s32.totalorder %s184, %s185
      %p194 = scmp.eq.s32.totalorder %s38, 0
      %p195 = por %p193, %p194
      %p196 = scmp.ne.s32.totalorder %s184, %s185
      %p197 = scmp.eq.s32.totalorder %s39, 1
      %p198 = por %p196, %p197
      %p200 = scmp.ne.s32.totalorder %s185, %s199
      %p201 = scmp.eq.s32.totalorder %s39, 0
      %p202 = por %p200, %p201
      %s204 = sadd.s32 %s203, 1
      %p207 = scmp.eq.s32.totalorder %s33, 1
      %p208 = scmp.ne.s32.totalorder %s203, %s205
      %p209 = scmp.eq.s32.totalorder %s33, 0
      %p210 = por %p208, %p209
      %p211 = scmp.ne.s32.totalorder %s203, %s205
      %p212 = scmp.eq.s32.totalorder %s38, 1
      %p213 = por %p211, %p212
      %p214 = scmp.ne.s32.totalorder %s205, %s206
      %p215 = scmp.eq.s32.totalorder %s38, 0
      %p216 = por %p214, %p215
      %p217 = scmp.ne.s32.totalorder %s205, %s206
      %p218 = scmp.eq.s32.totalorder %s39, 1
      %p219 = por %p217, %p218
      %p221 = scmp.ne.s32.totalorder %s206, %s220
      %p222 = scmp.eq.s32.totalorder %s39, 0
      %p223 = por %p221, %p222
      %s225 = sadd.s32 %s224, 1
      %p228 = scmp.eq.s32.totalorder %s33, 1
      %p229 = scmp.ne.s32.totalorder %s224, %s226
      %p230 = scmp.eq.s32.totalorder %s33, 0
      %p231 = por %p229, %p230
      %p232 = scmp.ne.s32.totalorder %s224, %s226
      %p233 = scmp.eq.s32.totalorder %s38, 1
      %p234 = por %p232, %p233
      %p235 = scmp.ne.s32.totalorder %s226, %s227
      %p236 = scmp.eq.s32.totalorder %s38, 0
      %p237 = por %p235, %p236
      %p238 = scmp.ne.s32.totalorder %s226, %s227
      %p239 = scmp.eq.s32.totalorder %s39, 1
      %p240 = por %p238, %p239
      %p242 = scmp.ne.s32.totalorder %s227, %s241
      %p243 = scmp.eq.s32.totalorder %s39, 0
      %p244 = por %p242, %p243
      %s246 = sadd.s32 %s245, 1
      %p249 = scmp.eq.s32.totalorder %s33, 1
      %p250 = scmp.ne.s32.totalorder %s245, %s247
      %p251 = scmp.eq.s32.totalorder %s33, 0
      %p252 = por %p250, %p251
      %p253 = scmp.ne.s32.totalorder %s245, %s247
      %p254 = scmp.eq.s32.totalorder %s38, 1
      %p255 = por %p253, %p254
      %p256 = scmp.ne.s32.totalorder %s247, %s248
      %p257 = scmp.eq.s32.totalorder %s38, 0
      %p258 = por %p256, %p257
      %p259 = scmp.ne.s32.totalorder %s247, %s248
      %p260 = scmp.eq.s32.totalorder %s39, 1
      %p261 = por %p259, %p260
      %p263 = scmp.ne.s32.totalorder %s248, %s262
      %p264 = scmp.eq.s32.totalorder %s39, 0
      %p265 = por %p263, %p264
      %s267 = sadd.s32 %s266, 1
      %p270 = scmp.eq.s32.totalorder %s33, 1
      %p271 = scmp.ne.s32.totalorder %s266, %s268
      %p272 = scmp.eq.s32.totalorder %s33, 0
      %p273 = por %p271, %p272
      %p274 = scmp.ne.s32.totalorder %s266, %s268
      %p275 = scmp.eq.s32.totalorder %s38, 1
      %p276 = por %p274, %p275
      %p277 = scmp.ne.s32.totalorder %s268, %s269
      %p278 = scmp.eq.s32.totalorder %s38, 0
      %p279 = por %p277, %p278
      %p280 = scmp.ne.s32.totalorder %s268, %s269
      %p281 = scmp.eq.s32.totalorder %s39, 1
      %p282 = por %p280, %p281
      %p284 = scmp.ne.s32.totalorder %s269, %s283
      %p285 = scmp.eq.s32.totalorder %s39, 0
      %p286 = por %p284, %p285
      %s288 = sadd.s32 %s287, 1
      %p291 = scmp.eq.s32.totalorder %s33, 1
      %p292 = scmp.ne.s32.totalorder %s287, %s289
      %p293 = scmp.eq.s32.totalorder %s33, 0
      %p294 = por %p292, %p293
      %p295 = scmp.ne.s32.totalorder %s287, %s289
      %p296 = scmp.eq.s32.totalorder %s38, 1
      %p297 = por %p295, %p296
      %p298 = scmp.ne.s32.totalorder %s289, %s290
      %p299 = scmp.eq.s32.totalorder %s38, 0
      %p300 = por %p298, %p299
      %p301 = scmp.ne.s32.totalorder %s289, %s290
      %p302 = scmp.eq.s32.totalorder %s39, 1
      %p303 = por %p301, %p302
      %p305 = scmp.ne.s32.totalorder %s290, %s304
      %p306 = scmp.eq.s32.totalorder %s39, 0
      %p307 = por %p305, %p306
      %s309 = sadd.s32 %s308, 1
      %p312 = scmp.eq.s32.totalorder %s33, 1
      %p313 = scmp.ne.s32.totalorder %s308, %s310
      %p314 = scmp.eq.s32.totalorder %s33, 0
      %p315 = por %p313, %p314
      %p316 = scmp.ne.s32.totalorder %s308, %s310
      %p317 = scmp.eq.s32.totalorder %s38, 1
      %p318 = por %p316, %p317
      %p319 = scmp.ne.s32.totalorder %s310, %s311
      %p320 = scmp.eq.s32.totalorder %s38, 0
      %p321 = por %p319, %p320
      %p322 = scmp.ne.s32.totalorder %s310, %s311
      %p323 = scmp.eq.s32.totalorder %s39, 1
      %p324 = por %p322, %p323
      %p326 = scmp.ne.s32.totalorder %s311, %s325
      %p327 = scmp.eq.s32.totalorder %s39, 0
      %p328 = por %p326, %p327
      %s330 = sadd.s32 %s329, 1
      %p333 = scmp.eq.s32.totalorder %s33, 1
      %p334 = scmp.ne.s32.totalorder %s329, %s331
      %p335 = scmp.eq.s32.totalorder %s33, 0
      %p336 = por %p334, %p335
      %p337 = scmp.ne.s32.totalorder %s329, %s331
      %p338 = scmp.eq.s32.totalorder %s38, 1
      %p339 = por %p337, %p338
      %p340 = scmp.ne.s32.totalorder %s331, %s332
      %p341 = scmp.eq.s32.totalorder %s38, 0
      %p342 = por %p340, %p341
      %p343 = scmp.ne.s32.totalorder %s331, %s332
      %p344 = scmp.eq.s32.totalorder %s39, 1
      %p345 = por %p343, %p344
      %p347 = scmp.ne.s32.totalorder %s332, %s346
      %p348 = scmp.eq.s32.totalorder %s39, 0
      %p349 = por %p347, %p348
      %s351 = sadd.s32 %s350, 1
      %p354 = scmp.eq.s32.totalorder %s33, 1
      %p355 = scmp.ne.s32.totalorder %s350, %s352
      %p356 = scmp.eq.s32.totalorder %s33, 0
      %p357 = por %p355, %p356
      %p358 = scmp.ne.s32.totalorder %s350, %s352
      %p359 = scmp.eq.s32.totalorder %s38, 1
      %p360 = por %p358, %p359
      %p361 = scmp.ne.s32.totalorder %s352, %s353
      %p362 = scmp.eq.s32.totalorder %s38, 0
      %p363 = por %p361, %p362
      %p364 = scmp.ne.s32.totalorder %s352, %s353
      %p365 = scmp.eq.s32.totalorder %s39, 1
      %p366 = por %p364, %p365
      %p368 = scmp.ne.s32.totalorder %s353, %s367
      %p369 = scmp.eq.s32.totalorder %s39, 0
      %p370 = por %p368, %p369
      %s371 = ssub.s32 %s33, %s40
      %p372 = scmp.eq.s32.totalorder %s371, 0
      %s374 = sadd.s32 %s373, 1
      %s375 = scalar_select %p372, %s373, %s374
      %p378 = pneg %p372
      %p379 = scmp.eq.s32.totalorder %s33, 1
      %p380 = por %p378, %p379
      %p381 = scmp.ne.s32.totalorder %s373, %s376
      %p382 = scmp.eq.s32.totalorder %s33, 0
      %p383 = por %p381, %p382
      %p384 = scmp.ne.s32.totalorder %s373, %s376
      %p385 = scmp.eq.s32.totalorder %s38, 1
      %p386 = por %p384, %p385
      %p387 = scmp.ne.s32.totalorder %s376, %s377
      %p388 = scmp.eq.s32.totalorder %s38, 0
      %p389 = por %p387, %p388
      %p390 = scmp.ne.s32.totalorder %s376, %s377
      %p391 = scmp.eq.s32.totalorder %s39, 1
      %p392 = por %p390, %p391
      %p394 = scmp.ne.s32.totalorder %s377, %s393
      %p395 = scmp.eq.s32.totalorder %s39, 0
      %p396 = por %p394, %p395
      %s398 = sadd.s32 %s397, 1
      %p401 = scmp.eq.s32.totalorder %s33, 1
      %p402 = scmp.ne.s32.totalorder %s397, %s399
      %p403 = scmp.eq.s32.totalorder %s33, 0
      %p404 = por %p402, %p403
      %p405 = scmp.ne.s32.totalorder %s397, %s399
      %p406 = scmp.eq.s32.totalorder %s38, 1
      %p407 = por %p405, %p406
      %p408 = scmp.ne.s32.totalorder %s399, %s400
      %p409 = scmp.eq.s32.totalorder %s38, 0
      %p410 = por %p408, %p409
      %p411 = scmp.ne.s32.totalorder %s399, %s400
      %p412 = scmp.eq.s32.totalorder %s39, 1
      %p413 = por %p411, %p412
      %p415 = scmp.ne.s32.totalorder %s400, %s414
      %p416 = scmp.eq.s32.totalorder %s39, 0
      %p417 = por %p415, %p416
      %s419 = sadd.s32 %s418, 1
      %p422 = scmp.eq.s32.totalorder %s33, 1
      %p423 = scmp.ne.s32.totalorder %s418, %s420
      %p424 = scmp.eq.s32.totalorder %s33, 0
      %p425 = por %p423, %p424
      %p426 = scmp.ne.s32.totalorder %s418, %s420
      %p427 = scmp.eq.s32.totalorder %s38, 1
      %p428 = por %p426, %p427
      %p429 = scmp.ne.s32.totalorder %s420, %s421
      %p430 = scmp.eq.s32.totalorder %s38, 0
      %p431 = por %p429, %p430
      %p432 = scmp.ne.s32.totalorder %s420, %s421
      %p433 = scmp.eq.s32.totalorder %s39, 1
      %p434 = por %p432, %p433
      %p436 = scmp.ne.s32.totalorder %s421, %s435
      %p437 = scmp.eq.s32.totalorder %s39, 0
      %p438 = por %p436, %p437
      %p439 = scmp.le.s32.totalorder 1, %s33
      %p440 = scmp.lt.s32.totalorder %s33, 3
      %p441 = pnand %p439, %p440
      %p442 = pneg %p441
      // Predicated region
      $region9: #{tpu_custom_call.1} parent=5 // pred_check
        _
      $region10: #{tpu_custom_call.1} parent=5 // pred_check_branch
        %444 = sbr.rel (%p441) target = $region12
      $region11: #{tpu_custom_call.1} parent=5 // pred_region
        %s445 = ssub.s32 %s33, 1
        // Predicated region
        $region13: #{tpu_custom_call.1} parent=11 // pred_check
          %p446 = pneg %p54
        $region14: #{tpu_custom_call.1} parent=11 // pred_check_branch
          %448 = sbr.rel (%p446) target = $region16
        $region15: #{tpu_custom_call.1} parent=11 // pred_region
          _
        $region16: #{tpu_custom_call.1} parent=11 // pred_fallthru
          _
        // Predicated region
        $region17: #{tpu_custom_call.1} parent=11 // pred_check
          %p449 = pneg %p153
        $region18: #{tpu_custom_call.1} parent=11 // pred_check_branch
          %451 = sbr.rel (%p449) target = $region20
        $region19: #{tpu_custom_call.1} parent=11 // pred_region
          %s453 = ssub.s32 6144, 6144
          %454 = vsyncadd [#allocation10], %s453
          %s455 = sshll.u32 [#allocation9], 4
          %s456 = int_to_ptr.vmem [resolvable:$true] %s455
          %461 = dma.hbm_to_vmem [thread:$0]  %s4, 6144, %s456, [#allocation10], 384, 384, 24
        $region20: #{tpu_custom_call.1} parent=11 // pred_fallthru
          _
        // Predicated region
        $region21: #{tpu_custom_call.1} parent=11 // pred_check
          %p462 = pneg %p174
        $region22: #{tpu_custom_call.1} parent=11 // pred_check_branch
          %464 = sbr.rel (%p462) target = $region24
        $region23: #{tpu_custom_call.1} parent=11 // pred_region
          _
        $region24: #{tpu_custom_call.1} parent=11 // pred_fallthru
          _
        // Predicated region
        $region25: #{tpu_custom_call.1} parent=11 // pred_check
          %p465 = pneg %p195
        $region26: #{tpu_custom_call.1} parent=11 // pred_check_branch
          %467 = sbr.rel (%p465) target = $region28
        $region27: #{tpu_custom_call.1} parent=11 // pred_region
          _
        $region28: #{tpu_custom_call.1} parent=11 // pred_fallthru
          _
        // Predicated region
        $region29: #{tpu_custom_call.1} parent=11 // pred_check
          %p468 = pneg %p216
        $region30: #{tpu_custom_call.1} parent=11 // pred_check_branch
          %470 = sbr.rel (%p468) target = $region32
        $region31: #{tpu_custom_call.1} parent=11 // pred_region
          _
        $region32: #{tpu_custom_call.1} parent=11 // pred_fallthru
          _
        // Predicated region
        $region33: #{tpu_custom_call.1} parent=11 // pred_check
          %p471 = pneg %p237
        $region34: #{tpu_custom_call.1} parent=11 // pred_check_branch
          %473 = sbr.rel (%p471) target = $region36
        $region35: #{tpu_custom_call.1} parent=11 // pred_region
          %s475 = ssub.s32 2048, 2048
          %476 = vsyncadd [#allocation10], %s475
          %s477 = sshll.u32 [#allocation11], 4
          %s478 = int_to_ptr.vmem [resolvable:$true] %s477
          %483 = dma.hbm_to_vmem [thread:$0]  %s8, 2048, %s478, [#allocation10], 128, 128, 8
        $region36: #{tpu_custom_call.1} parent=11 // pred_fallthru
          _
        // Predicated region
        $region37: #{tpu_custom_call.1} parent=11 // pred_check
          %p484 = pneg %p258
        $region38: #{tpu_custom_call.1} parent=11 // pred_check_branch
          %486 = sbr.rel (%p484) target = $region40
        $region39: #{tpu_custom_call.1} parent=11 // pred_region
          _
        $region40: #{tpu_custom_call.1} parent=11 // pred_fallthru
          _
        // Predicated region
        $region41: #{tpu_custom_call.1} parent=11 // pred_check
          %p487 = pneg %p279
        $region42: #{tpu_custom_call.1} parent=11 // pred_check_branch
          %489 = sbr.rel (%p487) target = $region44
        $region43: #{tpu_custom_call.1} parent=11 // pred_region
          _
        $region44: #{tpu_custom_call.1} parent=11 // pred_fallthru
          _
        // Predicated region
        $region45: #{tpu_custom_call.1} parent=11 // pred_check
          %p490 = pneg %p300
        $region46: #{tpu_custom_call.1} parent=11 // pred_check_branch
          %492 = sbr.rel (%p490) target = $region48
        $region47: #{tpu_custom_call.1} parent=11 // pred_region
          _
        $region48: #{tpu_custom_call.1} parent=11 // pred_fallthru
          _
        // Predicated region
        $region49: #{tpu_custom_call.1} parent=11 // pred_check
          %p493 = pneg %p321
        $region50: #{tpu_custom_call.1} parent=11 // pred_check_branch
          %495 = sbr.rel (%p493) target = $region52
        $region51: #{tpu_custom_call.1} parent=11 // pred_region
          _
        $region52: #{tpu_custom_call.1} parent=11 // pred_fallthru
          _
        // Predicated region
        $region53: #{tpu_custom_call.1} parent=11 // pred_check
          %p496 = pneg %p342
        $region54: #{tpu_custom_call.1} parent=11 // pred_check_branch
          %498 = sbr.rel (%p496) target = $region56
        $region55: #{tpu_custom_call.1} parent=11 // pred_region
          _
        $region56: #{tpu_custom_call.1} parent=11 // pred_fallthru
          _
      $region12: #{tpu_custom_call.1} parent=5 // pred_fallthru
        _
      %p499 = scmp.lt.s32.totalorder %s33, 2
      // Predicated region
      $region57: #{tpu_custom_call.1} parent=5 // pred_check
        %p500 = pneg %p499
      $region58: #{tpu_custom_call.1} parent=5 // pred_check_branch
        %502 = sbr.rel (%p500) target = $region60
      $region59: #{tpu_custom_call.1} parent=5 // pred_region
        // Predicated region
        $region61: #{tpu_custom_call.1} parent=59 // pred_check
          %p503 = pneg %p74
        $region62: #{tpu_custom_call.1} parent=59 // pred_check_branch
          %505 = sbr.rel (%p503) target = $region64
        $region63: #{tpu_custom_call.1} parent=59 // pred_region
          %s506 = sand.u32 %s64, 1
          %s507 = scalar_lea.sflag [#allocation7], %s506
          %s508 = sand.u32 %s64, 1
          %s509 = smul.addr %s508, 32
          %s510 = scalar_lea.vmem [#allocation6], %s509
          %s511 = smul.u32 4, %s33
          %s513 = ssub.s32 512, 512
          %514 = vsyncadd %s507, %s513
          %s515 = smul.addr %s511, 128
          %s516 = scalar_lea.hbm %s1, %s515
          %s517 = sshll.u32 %s510, 4
          %s518 = int_to_ptr.vmem [resolvable:$true] %s517
          %523 = dma.hbm_to_vmem [thread:$0]  %s516, 512, %s518, %s507, 128, 128, 8
        $region64: #{tpu_custom_call.1} parent=59 // pred_fallthru
          _
        // Predicated region
        $region65: #{tpu_custom_call.1} parent=59 // pred_check
          %p524 = pneg %p100
        $region66: #{tpu_custom_call.1} parent=59 // pred_check_branch
          %526 = sbr.rel (%p524) target = $region68
        $region67: #{tpu_custom_call.1} parent=59 // pred_region
          %s527 = smul.u32 4, %s33
          %p528 = scmp.lt.s32.totalorder %s527, 7
          %s529 = scalar_select %p528, %s527, 7
          %s530 = smul.addr %s529, 8
          %s531 = scalar_lea.vmem %s2, %s530
          %s532 = smul.u32 4, %s33
        $region68: #{tpu_custom_call.1} parent=59 // pred_fallthru
          _
        // Predicated region
        $region69: #{tpu_custom_call.1} parent=59 // pred_check
          %p533 = pneg %p126
        $region70: #{tpu_custom_call.1} parent=59 // pred_check_branch
          %535 = sbr.rel (%p533) target = $region72
        $region71: #{tpu_custom_call.1} parent=59 // pred_region
          %s536 = smul.u32 4, %s33
          %p537 = scmp.lt.s32.totalorder %s536, 7
          %s538 = scalar_select %p537, %s536, 7
          %s539 = smul.addr %s538, 8
          %s540 = scalar_lea.vmem %s3, %s539
          %s541 = smul.u32 4, %s33
        $region72: #{tpu_custom_call.1} parent=59 // pred_fallthru
          _
      $region60: #{tpu_custom_call.1} parent=5 // pred_fallthru
        _
      %p542 = scmp.le.s32.totalorder 1, %s33
      %p543 = scmp.lt.s32.totalorder %s33, 3
      %p544 = pnand %p542, %p543
      %p545 = pneg %p544
      // Predicated region
      $region73: #{tpu_custom_call.1} parent=5 // pred_check
        _
      $region74: #{tpu_custom_call.1} parent=5 // pred_check_branch
        %547 = sbr.rel (%p544) target = $region76
      $region75: #{tpu_custom_call.1} parent=5 // pred_region
        %s548 = ssub.s32 %s33, 1
        %s549 = sand.u32 %s67, 1
        %s550 = scalar_lea.sflag [#allocation7], %s549
        %s551 = sand.u32 %s67, 1
        %s552 = smul.addr %s551, 32
        %s553 = scalar_lea.vmem [#allocation6], %s552
        // Predicated region
        $region77: #{tpu_custom_call.1} parent=75 // pred_check
          %p554 = pneg %p80
        $region78: #{tpu_custom_call.1} parent=75 // pred_check_branch
          %556 = sbr.rel (%p554) target = $region80
        $region79: #{tpu_custom_call.1} parent=75 // pred_region
          %557 = dma.done %s550, 512
        $region80: #{tpu_custom_call.1} parent=75 // pred_fallthru
          _
        // Predicated region
        $region81: #{tpu_custom_call.1} parent=75 // pred_check
          %p558 = pneg %p153
        $region82: #{tpu_custom_call.1} parent=75 // pred_check_branch
          %560 = sbr.rel (%p558) target = $region84
        $region83: #{tpu_custom_call.1} parent=75 // pred_region
          %561 = dma.done [#allocation10], 6144
        $region84: #{tpu_custom_call.1} parent=75 // pred_fallthru
          _
        // Predicated region
        $region85: #{tpu_custom_call.1} parent=75 // pred_check
          %p562 = pneg %p237
        $region86: #{tpu_custom_call.1} parent=75 // pred_check_branch
          %564 = sbr.rel (%p562) target = $region88
        $region87: #{tpu_custom_call.1} parent=75 // pred_region
          %565 = dma.done [#allocation10], 2048
        $region88: #{tpu_custom_call.1} parent=75 // pred_fallthru
          _
        %p566 = pneg %p54
        %p567 = pneg %p51
        %s568 = sand.u32 %s67, 1
        %s569 = scalar_lea.sflag [#allocation7], %s568
        %s570 = sand.u32 %s67, 1
        %s571 = smul.addr %s570, 32
        %s572 = scalar_lea.vmem [#allocation6], %s571
        %p573 = pneg %p80
        %p574 = pneg %p77
        %s575 = smul.u32 4, %s38
        %p576 = scmp.lt.s32.totalorder %s575, 7
        %s577 = scalar_select %p576, %s575, 7
        %s578 = smul.addr %s577, 8
        %s579 = scalar_lea.vmem %s2, %s578
        %p580 = pneg %p106
        %p581 = pneg %p103
        %s582 = smul.u32 4, %s38
        %p583 = scmp.lt.s32.totalorder %s582, 7
        %s584 = scalar_select %p583, %s582, 7
        %s585 = smul.addr %s584, 8
        %s586 = scalar_lea.vmem %s3, %s585
        %p587 = pneg %p132
        %p588 = pneg %p129
        %p589 = pneg %p153
        %p590 = pneg %p150
        %p591 = pneg %p174
        %p592 = pneg %p171
        %p593 = pneg %p195
        %p594 = pneg %p192
        %p595 = pneg %p216
        %p596 = pneg %p213
        %p597 = pneg %p237
        %p598 = pneg %p234
        %p599 = pneg %p258
        %p600 = pneg %p255
        %p601 = pneg %p279
        %p602 = pneg %p276
        %p603 = pneg %p300
        %p604 = pneg %p297
        %p605 = pneg %p321
        %p606 = pneg %p318
        %p607 = pneg %p342
        %p608 = pneg %p339
        %p609 = pneg %p363
        %p610 = pneg %p360
        %p611 = pneg %p389
        %p612 = pneg %p386
        %s613 = sand.u32 %s38, 1
        %s614 = scalar_lea.sflag [#allocation14], %s613
        %s615 = sand.u32 %s376, 1
        %s616 = smul.addr %s615, 16
        %s617 = scalar_lea.vmem [#allocation13], %s616
        %p618 = pneg %p410
        %p619 = pneg %p407
        %p620 = pneg %p431
        %p621 = pneg %p428
        %s622 = smul.u32 4, %s38
        %s623 = smul.u32 4, %s38
        %p624 = scmp.lt.s32.totalorder %s623, 7
        %s625 = scalar_select %p624, %s623, 7
        %s626 = smul.addr %s625, 8
        %s627 = scalar_lea.vmem %s2, %s626
        %s628 = smul.u32 4, %s38
        %s629 = smul.u32 4, %s38
        %p630 = scmp.lt.s32.totalorder %s629, 7
        %s631 = scalar_select %p630, %s629, 7
        %s632 = smul.addr %s631, 8
        %s633 = scalar_lea.vmem %s3, %s632
        %s634 = smul.u32 4, %s38
        %s635 = smul.u32 4, %s38
        %p637 = scmp.eq.s32.totalorder %s38, 1
        %p638 = scmp.eq.s32.totalorder %s38, 0
        // Predicated region
        $region89: #{tpu_custom_call.1} parent=75 // pred_check
          %p639 = pneg %p638
        $region90: #{tpu_custom_call.1} parent=75 // pred_check_branch
          %641 = sbr.rel (%p639) target = $region92
        $region91: #{tpu_custom_call.1} parent=75 // pred_region
          %v642 = vld [vmem:[%s0] sm:$0xff]
          %v643 = vld [vmem:[%s0 + $0x8] sm:$0xff]
          %v644 = vld [vmem:[#allocation9] sm:$0xff]
          %v645 = vld [vmem:[#allocation9 + $0x8] sm:$0xff]
          %v646 = vld [vmem:[#allocation9 + $0x10] sm:$0xff]
          %v647 = vld [vmem:[#allocation9 + $0x18] sm:$0xff]
          %v648 = vld [vmem:[#allocation9 + $0x20] sm:$0xff]
          %v649 = vld [vmem:[#allocation9 + $0x28] sm:$0xff]
          %v650 = vld [vmem:[#allocation9 + $0x30] sm:$0xff]
          %v651 = vld [vmem:[#allocation9 + $0x38] sm:$0xff]
          %v652 = vld [vmem:[#allocation9 + $0x40] sm:$0xff]
          %v653 = vld [vmem:[#allocation9 + $0x48] sm:$0xff]
          %v654 = vld [vmem:[#allocation9 + $0x50] sm:$0xff]
          %v655 = vld [vmem:[#allocation9 + $0x58] sm:$0xff]
          %v656 = vld [vmem:[#allocation9 + $0x60] sm:$0xff]
          %v657 = vld [vmem:[#allocation9 + $0x68] sm:$0xff]
          %v658 = vld [vmem:[#allocation9 + $0x70] sm:$0xff]
          %v659 = vld [vmem:[#allocation9 + $0x78] sm:$0xff]
          %v660 = vld [vmem:[#allocation9 + $0x80] sm:$0xff]
          %v661 = vld [vmem:[#allocation9 + $0x88] sm:$0xff]
          %v662 = vld [vmem:[#allocation9 + $0x90] sm:$0xff]
          %v663 = vld [vmem:[#allocation9 + $0x98] sm:$0xff]
          %v664 = vld [vmem:[#allocation9 + $0xa0] sm:$0xff]
          %v665 = vld [vmem:[#allocation9 + $0xa8] sm:$0xff]
          %v666 = vld [vmem:[#allocation9 + $0xb0] sm:$0xff]
          %v667 = vld [vmem:[#allocation9 + $0xb8] sm:$0xff]
          %v668 = vld [vmem:[#allocation9 + $0xc0] sm:$0xff]
          %v669 = vld [vmem:[#allocation9 + $0xc8] sm:$0xff]
          %v670 = vld [vmem:[#allocation9 + $0xd0] sm:$0xff]
          %v671 = vld [vmem:[#allocation9 + $0xd8] sm:$0xff]
          %v672 = vld [vmem:[#allocation9 + $0xe0] sm:$0xff]
          %v673 = vld [vmem:[#allocation9 + $0xe8] sm:$0xff]
          %v674 = vld [vmem:[#allocation9 + $0xf0] sm:$0xff]
          %v675 = vld [vmem:[#allocation9 + $0xf8] sm:$0xff]
          %v676 = vld [vmem:[#allocation9 + $0x100] sm:$0xff]
          %v677 = vld [vmem:[#allocation9 + $0x108] sm:$0xff]
          %v678 = vld [vmem:[#allocation9 + $0x110] sm:$0xff]
          %v679 = vld [vmem:[#allocation9 + $0x118] sm:$0xff]
          %v680 = vld [vmem:[#allocation9 + $0x120] sm:$0xff]
          %v681 = vld [vmem:[#allocation9 + $0x128] sm:$0xff]
          %v682 = vld [vmem:[#allocation9 + $0x130] sm:$0xff]
          %v683 = vld [vmem:[#allocation9 + $0x138] sm:$0xff]
          %v684 = vld [vmem:[#allocation9 + $0x140] sm:$0xff]
          %v685 = vld [vmem:[#allocation9 + $0x148] sm:$0xff]
          %v686 = vld [vmem:[#allocation9 + $0x150] sm:$0xff]
          %v687 = vld [vmem:[#allocation9 + $0x158] sm:$0xff]
          %v688 = vld [vmem:[#allocation9 + $0x160] sm:$0xff]
          %v689 = vld [vmem:[#allocation9 + $0x168] sm:$0xff]
          %v690 = vld [vmem:[#allocation9 + $0x170] sm:$0xff]
          %v691 = vld [vmem:[#allocation9 + $0x178] sm:$0xff]
          %v692 = vld [vmem:[%s5] sm:$0x7]
          %v694 = vlaneseq
          %v695 = vshrl.u32 %v694, 7
          %v696 = vsub.s32 0, %v695
          %v697 = vrot.slane %v692, %v696
          %v698 = vlaneseq
          %v699 = vshrl.u32 %v698, 7
          %v700 = vsub.s32 1, %v699
          %v701 = vrot.slane %v692, %v700
          %v702 = vlaneseq
          %v703 = vshrl.u32 %v702, 7
          %v704 = vsub.s32 2, %v703
          %v705 = vrot.slane %v692, %v704
          %709 = vmatprep.subr.mxu0 %v645
          %710 = vmatpush1.msra.mxu0 %v644
          %711 = vmatprep.subr.mxu0 %v648
          %712 = vmatpush1.msra.mxu0 %v647
          %713 = vmatprep.subr.mxu0 %v651
          %714 = vmatpush1.msra.mxu0 %v650
          %715 = vmatprep.subr.mxu0 %v654
          %716 = vmatpush1.msra.mxu0 %v653
          %717 = vmatprep.subr.mxu0 %v657
          %718 = vmatpush1.msra.mxu0 %v656
          %719 = vmatprep.subr.mxu0 %v660
          %720 = vmatpush1.msra.mxu0 %v659
          %721 = vmatprep.subr.mxu0 %v663
          %722 = vmatpush1.msra.mxu0 %v662
          %723 = vmatprep.subr.mxu0 %v666
          %724 = vmatpush1.msra.mxu0 %v665
          %725 = vmatprep.subr.mxu0 %v669
          %726 = vmatpush1.msra.mxu0 %v668
          %727 = vmatprep.subr.mxu0 %v672
          %728 = vmatpush1.msra.mxu0 %v671
          %729 = vmatprep.subr.mxu0 %v675
          %730 = vmatpush1.msra.mxu0 %v674
          %731 = vmatprep.subr.mxu0 %v678
          %732 = vmatpush1.msra.mxu0 %v677
          %733 = vmatprep.subr.mxu0 %v681
          %734 = vmatpush1.msra.mxu0 %v680
          %735 = vmatprep.subr.mxu0 %v684
          %736 = vmatpush1.msra.mxu0 %v683
          %737 = vmatprep.subr.mxu0 %v687
          %738 = vmatpush1.msra.mxu0 %v686
          %739 = vmatprep.subr.mxu0 %v690
          %740 = vmatpush1.msra.mxu0 %v689
          %741 = vmatprep.subr.mxu0 0.0
          %742 = vmatpush1.msra.mxu0 0.0
          %743 = vmatprep.subr.mxu0 0.0
          %744 = vmatpush1.msra.mxu0 0.0
          %745 = vmatprep.subr.mxu0 0.0
          %746 = vmatpush1.msra.mxu0 0.0
          %747 = vmatprep.subr.mxu0 0.0
          %748 = vmatpush1.msra.mxu0 0.0
          %749 = vmatprep.subr.mxu0 0.0
          %750 = vmatpush1.msra.mxu0 0.0
          %751 = vmatprep.subr.mxu0 0.0
          %752 = vmatpush1.msra.mxu0 0.0
          %753 = vmatprep.subr.mxu0 0.0
          %754 = vmatpush1.msra.mxu0 0.0
          %755 = vmatprep.subr.mxu0 0.0
          %756 = vmatpush1.msra.mxu0 0.0
          %757 = vmatprep.subr.mxu0 0.0
          %758 = vmatpush1.msra.mxu0 0.0
          %759 = vmatprep.subr.mxu0 0.0
          %760 = vmatpush1.msra.mxu0 0.0
          %761 = vmatprep.subr.mxu0 0.0
          %762 = vmatpush1.msra.mxu0 0.0
          %763 = vmatprep.subr.mxu0 0.0
          %764 = vmatpush1.msra.mxu0 0.0
          %765 = vmatprep.subr.mxu0 0.0
          %766 = vmatpush1.msra.mxu0 0.0
          %767 = vmatprep.subr.mxu0 0.0
          %768 = vmatpush1.msra.mxu0 0.0
          %769 = vmatprep.subr.mxu0 0.0
          %770 = vmatpush1.msra.mxu0 0.0
          %771 = vmatprep.subr.mxu0 0.0
          %772 = vmatpush1.msra.mxu0 0.0
          %773 = vmatprep.mubr.f32.mxu0 0.0
          %774 = vmatmul.mubr.f32.gmra.mrb[0].mxu0 %v642
          %v775 = vpop.f32.mrb[0].mxu0
          %v776 = vadd.f32 %v697, %v775
          %v777 = vpop.f32.mrb[0].mxu0
          %v778 = vadd.f32 %v701, %v777
          %779 = vmatprep.mubr.f32.mxu0 0.0
          %780 = vmatmul.mubr.f32.gmra.mrb[0].mxu0 %v643
          %v781 = vpop.f32.mrb[0].mxu0
          %v782 = vadd.f32 %v697, %v781
          %v783 = vpop.f32.mrb[0].mxu0
          %v784 = vadd.f32 %v701, %v783
          %785 = vdwg.mxu0
          %786 = vmatprep.subr.mxu0 0.0
          %787 = vmatpush1.msra.mxu0 %v646
          %788 = vmatprep.subr.mxu0 0.0
          %789 = vmatpush1.msra.mxu0 %v649
          %790 = vmatprep.subr.mxu0 0.0
          %791 = vmatpush1.msra.mxu0 %v652
          %792 = vmatprep.subr.mxu0 0.0
          %793 = vmatpush1.msra.mxu0 %v655
          %794 = vmatprep.subr.mxu0 0.0
          %795 = vmatpush1.msra.mxu0 %v658
          %796 = vmatprep.subr.mxu0 0.0
          %797 = vmatpush1.msra.mxu0 %v661
          %798 = vmatprep.subr.mxu0 0.0
          %799 = vmatpush1.msra.mxu0 %v664
          %800 = vmatprep.subr.mxu0 0.0
          %801 = vmatpush1.msra.mxu0 %v667
          %802 = vmatprep.subr.mxu0 0.0
          %803 = vmatpush1.msra.mxu0 %v670
          %804 = vmatprep.subr.mxu0 0.0
          %805 = vmatpush1.msra.mxu0 %v673
          %806 = vmatprep.subr.mxu0 0.0
          %807 = vmatpush1.msra.mxu0 %v676
          %808 = vmatprep.subr.mxu0 0.0
          %809 = vmatpush1.msra.mxu0 %v679
          %810 = vmatprep.subr.mxu0 0.0
          %811 = vmatpush1.msra.mxu0 %v682
          %812 = vmatprep.subr.mxu0 0.0
          %813 = vmatpush1.msra.mxu0 %v685
          %814 = vmatprep.subr.mxu0 0.0
          %815 = vmatpush1.msra.mxu0 %v688
          %816 = vmatprep.subr.mxu0 0.0
          %817 = vmatpush1.msra.mxu0 %v691
          %818 = vmatprep.subr.mxu0 0.0
          %819 = vmatpush1.msra.mxu0 0.0
          %820 = vmatprep.subr.mxu0 0.0
          %821 = vmatpush1.msra.mxu0 0.0
          %822 = vmatprep.subr.mxu0 0.0
          %823 = vmatpush1.msra.mxu0 0.0
          %824 = vmatprep.subr.mxu0 0.0
          %825 = vmatpush1.msra.mxu0 0.0
          %826 = vmatprep.subr.mxu0 0.0
          %827 = vmatpush1.msra.mxu0 0.0
          %828 = vmatprep.subr.mxu0 0.0
          %829 = vmatpush1.msra.mxu0 0.0
          %830 = vmatprep.subr.mxu0 0.0
          %831 = vmatpush1.msra.mxu0 0.0
          %832 = vmatprep.subr.mxu0 0.0
          %833 = vmatpush1.msra.mxu0 0.0
          %834 = vmatprep.subr.mxu0 0.0
          %835 = vmatpush1.msra.mxu0 0.0
          %836 = vmatprep.subr.mxu0 0.0
          %837 = vmatpush1.msra.mxu0 0.0
          %838 = vmatprep.subr.mxu0 0.0
          %839 = vmatpush1.msra.mxu0 0.0
          %840 = vmatprep.subr.mxu0 0.0
          %841 = vmatpush1.msra.mxu0 0.0
          %842 = vmatprep.subr.mxu0 0.0
          %843 = vmatpush1.msra.mxu0 0.0
          %844 = vmatprep.subr.mxu0 0.0
          %845 = vmatpush1.msra.mxu0 0.0
          %846 = vmatprep.subr.mxu0 0.0
          %847 = vmatpush1.msra.mxu0 0.0
          %848 = vmatprep.subr.mxu0 0.0
          %849 = vmatpush1.msra.mxu0 0.0
          %850 = vmatprep.mubr.f32.mxu0 0.0
          %851 = vmatmul.mubr.f32.gmra.mrb[0].mxu0 %v642
          %v852 = vpop.f32.mrb[0].mxu0
          %v853 = vadd.f32 %v705, %v852
          %v854 = vpop.f32.mrb[0].mxu0
          %855 = vmatprep.mubr.f32.mxu0 0.0
          %856 = vmatmul.mubr.f32.gmra.mrb[0].mxu0 %v643
          %v857 = vpop.f32.mrb[0].mxu0
          %v858 = vadd.f32 %v705, %v857
          %v859 = vpop.f32.mrb[0].mxu0
          %860 = vdwg.mxu0
          %v861 = vpack.c.bf16 %v782, %v776
          %v862 = vpack.c.bf16 %v784, %v778
          %v863 = vpack.c.bf16 %v858, %v853
          %864 = vst [vmem:[#allocation2] sm:$0xff] %v861
          %865 = vst [vmem:[#allocation2 + $0x8] sm:$0xff] %v862
          %866 = vst [vmem:[#allocation2 + $0x10] sm:$0xff] %v863
          %867 = vst [vmem:[#allocation3] sm:$0xff] 0.0
          %868 = vst [vmem:[#allocation3 + $0x8] sm:$0xff] 0.0
          %869 = vst [vmem:[#allocation3 + $0x10] sm:$0xff] 0.0
          %870 = vst [vmem:[#allocation3 + $0x18] sm:$0xff] 0.0
          %871 = vst [vmem:[#allocation4] sm:$0x1] 0.0
          %872 = vst [vmem:[#allocation5] sm:$0x1] 0.0
        $region92: #{tpu_custom_call.1} parent=75 // pred_fallthru
          _
        %v873 = vlaneseq
        %v874 = vand.u32 %v873, 127
        %v875 = vld [vmem:[%s627] sm:$0xff]
        %v876 = vld [vmem:[%s627 + $0x8] sm:$0xff]
        %v877 = vld [vmem:[%s627 + $0x10] sm:$0xff]
        %v878 = vld [vmem:[%s627 + $0x18] sm:$0xff]
        %879 = vset.pattern.permute.xlu0 0
        %880 = vperm.xlu0 %879, %v875
        %v881 = vpop.permute.xlu0 %880
        %882 = vset.pattern.permute.xlu0 0
        %883 = vperm.xlu0 %882, %v876
        %v884 = vpop.permute.xlu0 %883
        %885 = vset.pattern.permute.xlu0 0
        %886 = vperm.xlu0 %885, %v877
        %v887 = vpop.permute.xlu0 %886
        %888 = vset.pattern.permute.xlu0 0
        %889 = vperm.xlu0 %888, %v878
        %v890 = vpop.permute.xlu0 %889
        %vm891 = vcmp.eq.s32.totalorder %v881, %v874
        %vm892 = vcmp.eq.s32.totalorder %v884, %v874
        %vm893 = vcmp.eq.s32.totalorder %v887, %v874
        %vm894 = vcmp.eq.s32.totalorder %v890, %v874
        %v895 = vsel %vm891, 1, 0
        %v896 = vsel %vm892, 1, 0
        %v897 = vsel %vm893, 1, 0
        %v898 = vsel %vm894, 1, 0
        %v899 = vcvt.s32.f32 %v895
        %v900 = vcvt.s32.f32 %v896
        %v901 = vcvt.s32.f32 %v897
        %v902 = vcvt.s32.f32 %v898
        %v903 = vpack.c.bf16 %v900, %v899
        %v904 = vpack.c.bf16 %v902, %v901
        %v905 = vld [vmem:[%s633] sm:$0xff]
        %v906 = vld [vmem:[%s633 + $0x8] sm:$0xff]
        %v907 = vld [vmem:[%s633 + $0x10] sm:$0xff]
        %v908 = vld [vmem:[%s633 + $0x18] sm:$0xff]
        %909 = vset.pattern.permute.xlu0 0
        %910 = vperm.xlu0 %909, %v905
        %v911 = vpop.permute.xlu0 %910
        %912 = vset.pattern.permute.xlu0 0
        %913 = vperm.xlu0 %912, %v906
        %v914 = vpop.permute.xlu0 %913
        %915 = vset.pattern.permute.xlu0 0
        %916 = vperm.xlu0 %915, %v907
        %v917 = vpop.permute.xlu0 %916
        %918 = vset.pattern.permute.xlu0 0
        %919 = vperm.xlu0 %918, %v908
        %v920 = vpop.permute.xlu0 %919
        %vm921 = vcmp.eq.s32.totalorder %v911, %v874
        %vm922 = vcmp.eq.s32.totalorder %v914, %v874
        %vm923 = vcmp.eq.s32.totalorder %v917, %v874
        %vm924 = vcmp.eq.s32.totalorder %v920, %v874
        %v925 = vsel %vm921, 1, 0
        %v926 = vsel %vm922, 1, 0
        %v927 = vsel %vm923, 1, 0
        %v928 = vsel %vm924, 1, 0
        %v929 = vcvt.s32.f32 %v925
        %v930 = vcvt.s32.f32 %v926
        %v931 = vcvt.s32.f32 %v927
        %v932 = vcvt.s32.f32 %v928
        %v933 = vpack.c.bf16 %v930, %v929
        %v934 = vpack.c.bf16 %v932, %v931
        %v935 = vld [vmem:[#allocation2] sm:$0xff]
        %v936 = vld [vmem:[#allocation2 + $0x8] sm:$0xff]
        %v937 = vld [vmem:[#allocation2 + $0x10] sm:$0xff]
        %vm938 = vcmask 130048
        %v940 = vsel %vm938, %v933, 0
        %v943 = vsel %vm938, %v934, 0
        %945 = vmatprep.subr.bf16.mxu0 %v937
        %946 = vmatpush1.bf16.msra.mxu0 %v936
        %947 = vmatprep.subr.bf16.mxu0 0
        %948 = vmatpush1.bf16.msra.mxu0 0
        %949 = vmatprep.subr.bf16.mxu0 0
        %950 = vmatpush1.bf16.msra.mxu0 0
        %951 = vmatprep.subr.bf16.mxu0 0
        %952 = vmatpush1.bf16.msra.mxu0 0
        %953 = vmatprep.subr.bf16.mxu0 0
        %954 = vmatpush1.bf16.msra.mxu0 0
        %955 = vmatprep.subr.bf16.mxu0 0
        %956 = vmatpush1.bf16.msra.mxu0 0
        %957 = vmatprep.subr.bf16.mxu0 0
        %958 = vmatpush1.bf16.msra.mxu0 0
        %959 = vmatprep.subr.bf16.mxu0 0
        %960 = vmatpush1.bf16.msra.mxu0 0
        %961 = vmatprep.subr.bf16.mxu0 0
        %962 = vmatpush1.bf16.msra.mxu0 0
        %963 = vmatprep.subr.bf16.mxu0 0
        %964 = vmatpush1.bf16.msra.mxu0 0
        %965 = vmatprep.subr.bf16.mxu0 0
        %966 = vmatpush1.bf16.msra.mxu0 0
        %967 = vmatprep.subr.bf16.mxu0 0
        %968 = vmatpush1.bf16.msra.mxu0 0
        %969 = vmatprep.subr.bf16.mxu0 0
        %970 = vmatpush1.bf16.msra.mxu0 0
        %971 = vmatprep.subr.bf16.mxu0 0
        %972 = vmatpush1.bf16.msra.mxu0 0
        %973 = vmatprep.subr.bf16.mxu0 0
        %974 = vmatpush1.bf16.msra.mxu0 0
        %975 = vmatprep.subr.bf16.mxu0 0
        %976 = vmatpush1.bf16.msra.mxu0 0
        %977 = vmatprep.mubr.bf16.mxu0 0
        %978 = vmatmul.mubr.bf16.gmra.mrb[0].mxu0 %v940
        %v979 = vpop.f32.mrb[0].mxu0
        %v980 = vadd.f32 0.0, %v979
        %v981 = vpop.f32.mrb[0].mxu0
        %v982 = vadd.f32 0.0, %v981
        %v983 = vpop.f32.mrb[0].mxu0
        %v984 = vadd.f32 0.0, %v983
        %v985 = vpop.f32.mrb[0].mxu0
        %v986 = vadd.f32 0.0, %v985
        %987 = vmatprep.mubr.bf16.mxu0 0
        %988 = vmatmul.mubr.bf16.gmra.mrb[0].mxu0 %v943
        %v989 = vpop.f32.mrb[0].mxu0
        %v990 = vadd.f32 0.0, %v989
        %v991 = vpop.f32.mrb[0].mxu0
        %v992 = vadd.f32 0.0, %v991
        %v993 = vpop.f32.mrb[0].mxu0
        %v994 = vadd.f32 0.0, %v993
        %v995 = vpop.f32.mrb[0].mxu0
        %v996 = vadd.f32 0.0, %v995
        %997 = vdwg.mxu0
        %v998 = vld [vmem:[%s553] sm:$0xff]
        %v999 = vld [vmem:[%s553 + $0x8] sm:$0xff]
        %v1000 = vld [vmem:[%s553 + $0x10] sm:$0xff]
        %v1001 = vld [vmem:[%s553 + $0x18] sm:$0xff]
        %v1002 = vld [vmem:[%s6] sm:$0xff]
        %v1003 = vld [vmem:[%s6 + $0x8] sm:$0xff]
        %v1004 = vld [vmem:[%s6 + $0x10] sm:$0xff]
        %v1005 = vld [vmem:[%s6 + $0x18] sm:$0xff]
        %v1006 = vld [vmem:[%s6 + $0x20] sm:$0xff]
        %v1007 = vld [vmem:[%s6 + $0x28] sm:$0xff]
        %v1008 = vld [vmem:[%s6 + $0x30] sm:$0xff]
        %v1009 = vld [vmem:[%s6 + $0x38] sm:$0xff]
        %v1010 = vld [vmem:[%s6 + $0x40] sm:$0xff]
        %v1011 = vld [vmem:[%s6 + $0x48] sm:$0xff]
        %v1012 = vld [vmem:[%s6 + $0x50] sm:$0xff]
        %v1013 = vld [vmem:[%s6 + $0x58] sm:$0xff]
        %v1014 = vld [vmem:[%s6 + $0x60] sm:$0xff]
        %v1015 = vld [vmem:[%s6 + $0x68] sm:$0xff]
        %v1016 = vld [vmem:[%s6 + $0x70] sm:$0xff]
        %v1017 = vld [vmem:[%s6 + $0x78] sm:$0xff]
        %v1018 = vld [vmem:[%s7] sm:$0x1]
        %v1020 = vlaneseq
        %v1021 = vshrl.u32 %v1020, 7
        %v1022 = vsub.s32 0, %v1021
        %v1023 = vrot.slane %v1018, %v1022
        %1025 = vmatprep.subr.mxu0 0.0
        %1026 = vmatpush1.msra.mxu0 %v1002
        %1027 = vmatprep.subr.mxu0 0.0
        %1028 = vmatpush1.msra.mxu0 %v1003
        %1029 = vmatprep.subr.mxu0 0.0
        %1030 = vmatpush1.msra.mxu0 %v1004
        %1031 = vmatprep.subr.mxu0 0.0
        %1032 = vmatpush1.msra.mxu0 %v1005
        %1033 = vmatprep.subr.mxu0 0.0
        %1034 = vmatpush1.msra.mxu0 %v1006
        %1035 = vmatprep.subr.mxu0 0.0
        %1036 = vmatpush1.msra.mxu0 %v1007
        %1037 = vmatprep.subr.mxu0 0.0
        %1038 = vmatpush1.msra.mxu0 %v1008
        %1039 = vmatprep.subr.mxu0 0.0
        %1040 = vmatpush1.msra.mxu0 %v1009
        %1041 = vmatprep.subr.mxu0 0.0
        %1042 = vmatpush1.msra.mxu0 %v1010
        %1043 = vmatprep.subr.mxu0 0.0
        %1044 = vmatpush1.msra.mxu0 %v1011
        %1045 = vmatprep.subr.mxu0 0.0
        %1046 = vmatpush1.msra.mxu0 %v1012
        %1047 = vmatprep.subr.mxu0 0.0
        %1048 = vmatpush1.msra.mxu0 %v1013
        %1049 = vmatprep.subr.mxu0 0.0
        %1050 = vmatpush1.msra.mxu0 %v1014
        %1051 = vmatprep.subr.mxu0 0.0
        %1052 = vmatpush1.msra.mxu0 %v1015
        %1053 = vmatprep.subr.mxu0 0.0
        %1054 = vmatpush1.msra.mxu0 %v1016
        %1055 = vmatprep.subr.mxu0 0.0
        %1056 = vmatpush1.msra.mxu0 %v1017
        %1057 = vmatprep.subr.mxu0 0.0
        %1058 = vmatpush1.msra.mxu0 0.0
        %1059 = vmatprep.subr.mxu0 0.0
        %1060 = vmatpush1.msra.mxu0 0.0
        %1061 = vmatprep.subr.mxu0 0.0
        %1062 = vmatpush1.msra.mxu0 0.0
        %1063 = vmatprep.subr.mxu0 0.0
        %1064 = vmatpush1.msra.mxu0 0.0
        %1065 = vmatprep.subr.mxu0 0.0
        %1066 = vmatpush1.msra.mxu0 0.0
        %1067 = vmatprep.subr.mxu0 0.0
        %1068 = vmatpush1.msra.mxu0 0.0
        %1069 = vmatprep.subr.mxu0 0.0
        %1070 = vmatpush1.msra.mxu0 0.0
        %1071 = vmatprep.subr.mxu0 0.0
        %1072 = vmatpush1.msra.mxu0 0.0
        %1073 = vmatprep.subr.mxu0 0.0
        %1074 = vmatpush1.msra.mxu0 0.0
        %1075 = vmatprep.subr.mxu0 0.0
        %1076 = vmatpush1.msra.mxu0 0.0
        %1077 = vmatprep.subr.mxu0 0.0
        %1078 = vmatpush1.msra.mxu0 0.0
        %1079 = vmatprep.subr.mxu0 0.0
        %1080 = vmatpush1.msra.mxu0 0.0
        %1081 = vmatprep.subr.mxu0 0.0
        %1082 = vmatpush1.msra.mxu0 0.0
        %1083 = vmatprep.subr.mxu0 0.0
        %1084 = vmatpush1.msra.mxu0 0.0
        %1085 = vmatprep.subr.mxu0 0.0
        %1086 = vmatpush1.msra.mxu0 0.0
        %1087 = vmatprep.subr.mxu0 0.0
        %1088 = vmatpush1.msra.mxu0 0.0
        %1089 = vmatprep.mubr.f32.mxu0 0.0
        %1090 = vmatmul.mubr.f32.gmra.mrb[0].mxu0 %v998
        %v1091 = vpop.f32.mrb[0].mxu0
        %v1092 = vadd.f32 %v1023, %v1091
        %v1093 = vpop.f32.mrb[0].mxu0
        %1094 = vmatprep.mubr.f32.mxu0 0.0
        %1095 = vmatmul.mubr.f32.gmra.mrb[0].mxu0 %v999
        %v1096 = vpop.f32.mrb[0].mxu0
        %v1097 = vadd.f32 %v1023, %v1096
        %v1098 = vpop.f32.mrb[0].mxu0
        %1099 = vmatprep.mubr.f32.mxu0 0.0
        %1100 = vmatmul.mubr.f32.gmra.mrb[0].mxu0 %v1000
        %v1101 = vpop.f32.mrb[0].mxu0
        %v1102 = vadd.f32 %v1023, %v1101
        %v1103 = vpop.f32.mrb[0].mxu0
        %1104 = vmatprep.mubr.f32.mxu0 0.0
        %1105 = vmatmul.mubr.f32.gmra.mrb[0].mxu0 %v1001
        %v1106 = vpop.f32.mrb[0].mxu0
        %v1107 = vadd.f32 %v1023, %v1106
        %v1108 = vpop.f32.mrb[0].mxu0
        %1109 = vdwg.mxu0
        %v1111 = vsel %vm938, %v903, 0
        %v1114 = vsel %vm938, %v904, 0
        %1116 = vmatprep.subr.bf16.mxu0 0
        %1117 = vmatpush1.bf16.msra.mxu0 %v935
        %1118 = vmatprep.subr.bf16.mxu0 0
        %1119 = vmatpush1.bf16.msra.mxu0 0
        %1120 = vmatprep.subr.bf16.mxu0 0
        %1121 = vmatpush1.bf16.msra.mxu0 0
        %1122 = vmatprep.subr.bf16.mxu0 0
        %1123 = vmatpush1.bf16.msra.mxu0 0
        %1124 = vmatprep.subr.bf16.mxu0 0
        %1125 = vmatpush1.bf16.msra.mxu0 0
        %1126 = vmatprep.subr.bf16.mxu0 0
        %1127 = vmatpush1.bf16.msra.mxu0 0
        %1128 = vmatprep.subr.bf16.mxu0 0
        %1129 = vmatpush1.bf16.msra.mxu0 0
        %1130 = vmatprep.subr.bf16.mxu0 0
        %1131 = vmatpush1.bf16.msra.mxu0 0
        %1132 = vmatprep.subr.bf16.mxu0 0
        %1133 = vmatpush1.bf16.msra.mxu0 0
        %1134 = vmatprep.subr.bf16.mxu0 0
        %1135 = vmatpush1.bf16.msra.mxu0 0
        %1136 = vmatprep.subr.bf16.mxu0 0
        %1137 = vmatpush1.bf16.msra.mxu0 0
        %1138 = vmatprep.subr.bf16.mxu0 0
        %1139 = vmatpush1.bf16.msra.mxu0 0
        %1140 = vmatprep.subr.bf16.mxu0 0
        %1141 = vmatpush1.bf16.msra.mxu0 0
        %1142 = vmatprep.subr.bf16.mxu0 0
        %1143 = vmatpush1.bf16.msra.mxu0 0
        %1144 = vmatprep.subr.bf16.mxu0 0
        %1145 = vmatpush1.bf16.msra.mxu0 0
        %1146 = vmatprep.subr.bf16.mxu0 0
        %1147 = vmatpush1.bf16.msra.mxu0 0
        %1148 = vmatprep.mubr.bf16.mxu0 0
        %1149 = vmatmul.mubr.bf16.gmra.mrb[0].mxu0 %v1111
        %v1150 = vpop.f32.mrb[0].mxu0
        %v1151 = vadd.f32 %v980, %v1150
        %v1152 = vpop.f32.mrb[0].mxu0
        %v1153 = vpop.f32.mrb[0].mxu0
        %v1154 = vadd.f32 %v984, %v1153
        %v1155 = vpop.f32.mrb[0].mxu0
        %1156 = vmatprep.mubr.bf16.mxu0 0
        %1157 = vmatmul.mubr.bf16.gmra.mrb[0].mxu0 %v1114
        %v1158 = vpop.f32.mrb[0].mxu0
        %v1159 = vadd.f32 %v990, %v1158
        %v1160 = vpop.f32.mrb[0].mxu0
        %v1161 = vpop.f32.mrb[0].mxu0
        %v1162 = vadd.f32 %v994, %v1161
        %v1163 = vpop.f32.mrb[0].mxu0
        %1164 = vdwg.mxu0
        %v1165 = vadd.f32 %v1151, %v1092
        %v1166 = vadd.f32 %v1154, %v1097
        %v1167 = vadd.f32 %v1159, %v1102
        %v1168 = vadd.f32 %v1162, %v1107
        %v1169 = vsub.f32 0.0, %v1165
        %v1170 = vsub.f32 0.0, %v1166
        %v1171 = vsub.f32 0.0, %v1167
        %v1172 = vsub.f32 0.0, %v1168
        %v1173 = vmul.f32 %v1169, 1.442695
        %v1174 = vpow.pop %v1173
        %v1175 = vmul.f32 %v1170, 1.442695
        %v1176 = vpow.pop %v1175
        %v1177 = vmul.f32 %v1171, 1.442695
        %v1178 = vpow.pop %v1177
        %v1179 = vmul.f32 %v1172, 1.442695
        %v1180 = vpow.pop %v1179
        %v1181 = vadd.f32 %v1174, 1.0
        %v1182 = vadd.f32 %v1176, 1.0
        %v1183 = vadd.f32 %v1178, 1.0
        %v1184 = vadd.f32 %v1180, 1.0
        %v1185 = vrcp.pop %v1181
        %v1186 = vrcp.pop %v1182
        %v1187 = vrcp.pop %v1183
        %v1188 = vrcp.pop %v1184
        %v1189 = vmul.f32 %v982, %v1185
        %v1190 = vmul.f32 %v986, %v1186
        %v1191 = vmul.f32 %v992, %v1187
        %v1192 = vmul.f32 %v996, %v1188
        %v1193 = vld [vmem:[#allocation3] sm:$0xff]
        %v1194 = vld [vmem:[#allocation3 + $0x10] sm:$0xff]
        %v1195 = vpack.c.bf16 %v1190, %v1189
        %v1196 = vpack.c.bf16 %v1192, %v1191
        %1197 = vxpose.xlu0.c.b16.start [1/8] %v903, 128
        %1198 = vxpose.xlu0.c.b16.cont [2/8] %v904, 128
        %1199 = vxpose.xlu0.c.b16.cont [3/8] 0, 128
        %1200 = vxpose.xlu0.c.b16.cont [4/8] 0, 128
        %1201 = vxpose.xlu0.c.b16.cont [5/8] 0, 128
        %1202 = vxpose.xlu0.c.b16.cont [6/8] 0, 128
        %1203 = vxpose.xlu0.c.b16.cont [7/8] 0, 128
        %1204 = vxpose.xlu0.c.b16.end [8/8] 0, 128
        %v1205 = vpop.trf.xlu0
        %v1206 = vpop.trf.xlu0
        %v1207 = vpop.trf.xlu0
        %v1208 = vpop.trf.xlu0
        %v1209 = vpop.trf.xlu0
        %v1210 = vpop.trf.xlu0
        %v1211 = vpop.trf.xlu0
        %v1212 = vpop.trf.xlu0
        %vm1213 = vcmask 261120
        %v1215 = vsel %vm1213, %v1205, 0
        %1217 = vmatprep.subr.bf16.mxu0 0
        %1218 = vmatpush1.bf16.msra.mxu0 %v1195
        %1219 = vmatprep.subr.bf16.mxu0 0
        %1220 = vmatpush1.bf16.msra.mxu0 %v1196
        %1221 = vmatprep.subr.bf16.mxu0 0
        %1222 = vmatpush1.bf16.msra.mxu0 0
        %1223 = vmatprep.subr.bf16.mxu0 0
        %1224 = vmatpush1.bf16.msra.mxu0 0
        %1225 = vmatprep.subr.bf16.mxu0 0
        %1226 = vmatpush1.bf16.msra.mxu0 0
        %1227 = vmatprep.subr.bf16.mxu0 0
        %1228 = vmatpush1.bf16.msra.mxu0 0
        %1229 = vmatprep.subr.bf16.mxu0 0
        %1230 = vmatpush1.bf16.msra.mxu0 0
        %1231 = vmatprep.subr.bf16.mxu0 0
        %1232 = vmatpush1.bf16.msra.mxu0 0
        %1233 = vmatprep.subr.bf16.mxu0 0
        %1234 = vmatpush1.bf16.msra.mxu0 0
        %1235 = vmatprep.subr.bf16.mxu0 0
        %1236 = vmatpush1.bf16.msra.mxu0 0
        %1237 = vmatprep.subr.bf16.mxu0 0
        %1238 = vmatpush1.bf16.msra.mxu0 0
        %1239 = vmatprep.subr.bf16.mxu0 0
        %1240 = vmatpush1.bf16.msra.mxu0 0
        %1241 = vmatprep.subr.bf16.mxu0 0
        %1242 = vmatpush1.bf16.msra.mxu0 0
        %1243 = vmatprep.subr.bf16.mxu0 0
        %1244 = vmatpush1.bf16.msra.mxu0 0
        %1245 = vmatprep.subr.bf16.mxu0 0
        %1246 = vmatpush1.bf16.msra.mxu0 0
        %1247 = vmatprep.subr.bf16.mxu0 0
        %1248 = vmatpush1.bf16.msra.mxu0 0
        %1249 = vmatprep.mubr.bf16.mxu0 0
        %1250 = vmatmul.mubr.bf16.gmra.mrb[0].mxu0 %v1215
        %v1251 = vpop.f32.mrb[0].mxu0
        %v1252 = vadd.f32 0.0, %v1251
        %v1253 = vpop.f32.mrb[0].mxu0
        %v1254 = vpop.f32.mrb[0].mxu0
        %v1255 = vadd.f32 0.0, %v1254
        %v1256 = vpop.f32.mrb[0].mxu0
        %1257 = vdwg.mxu0
        %v1258 = vadd.f32 %v1193, %v1252
        %v1259 = vadd.f32 %v1194, %v1255
        %1260 = vst [vmem:[#allocation3] sm:$0xff] %v1258
        %1261 = vst [vmem:[#allocation3 + $0x10] sm:$0xff] %v1259
        %v1262 = vld [vmem:[#allocation3 + $0x8] sm:$0xff]
        %v1263 = vld [vmem:[#allocation3 + $0x18] sm:$0xff]
        %v1264 = vpack.c.bf16 %v1186, %v1185
        %v1265 = vpack.c.bf16 %v1188, %v1187
        %1266 = vmatprep.subr.bf16.mxu0 0
        %1267 = vmatpush1.bf16.msra.mxu0 %v1264
        %1268 = vmatprep.subr.bf16.mxu0 0
        %1269 = vmatpush1.bf16.msra.mxu0 %v1265
        %1270 = vmatprep.subr.bf16.mxu0 0
        %1271 = vmatpush1.bf16.msra.mxu0 0
        %1272 = vmatprep.subr.bf16.mxu0 0
        %1273 = vmatpush1.bf16.msra.mxu0 0
        %1274 = vmatprep.subr.bf16.mxu0 0
        %1275 = vmatpush1.bf16.msra.mxu0 0
        %1276 = vmatprep.subr.bf16.mxu0 0
        %1277 = vmatpush1.bf16.msra.mxu0 0
        %1278 = vmatprep.subr.bf16.mxu0 0
        %1279 = vmatpush1.bf16.msra.mxu0 0
        %1280 = vmatprep.subr.bf16.mxu0 0
        %1281 = vmatpush1.bf16.msra.mxu0 0
        %1282 = vmatprep.subr.bf16.mxu0 0
        %1283 = vmatpush1.bf16.msra.mxu0 0
        %1284 = vmatprep.subr.bf16.mxu0 0
        %1285 = vmatpush1.bf16.msra.mxu0 0
        %1286 = vmatprep.subr.bf16.mxu0 0
        %1287 = vmatpush1.bf16.msra.mxu0 0
        %1288 = vmatprep.subr.bf16.mxu0 0
        %1289 = vmatpush1.bf16.msra.mxu0 0
        %1290 = vmatprep.subr.bf16.mxu0 0
        %1291 = vmatpush1.bf16.msra.mxu0 0
        %1292 = vmatprep.subr.bf16.mxu0 0
        %1293 = vmatpush1.bf16.msra.mxu0 0
        %1294 = vmatprep.subr.bf16.mxu0 0
        %1295 = vmatpush1.bf16.msra.mxu0 0
        %1296 = vmatprep.subr.bf16.mxu0 0
        %1297 = vmatpush1.bf16.msra.mxu0 0
        %1298 = vmatprep.mubr.bf16.mxu0 0
        %1299 = vmatmul.mubr.bf16.gmra.mrb[0].mxu0 %v1215
        %v1300 = vpop.f32.mrb[0].mxu0
        %v1301 = vadd.f32 0.0, %v1300
        %v1302 = vpop.f32.mrb[0].mxu0
        %v1303 = vpop.f32.mrb[0].mxu0
        %v1304 = vadd.f32 0.0, %v1303
        %v1305 = vpop.f32.mrb[0].mxu0
        %1306 = vdwg.mxu0
        %v1307 = vadd.f32 %v1262, %v1301
        %v1308 = vadd.f32 %v1263, %v1304
        %1309 = vst [vmem:[#allocation3 + $0x8] sm:$0xff] %v1307
        %1310 = vst [vmem:[#allocation3 + $0x18] sm:$0xff] %v1308
        %v1311 = vpack.c.bf16 %v1166, %v1165
        %v1312 = vpack.c.bf16 %v1168, %v1167
        %v1315 = vunpack.c.l.b16 %v1311
        %v1316 = vunpack.c.h.b16 %v1311
        %v1317 = vunpack.c.l.b16 %v1312
        %v1318 = vunpack.c.h.b16 %v1312
        %v1319 = vpack.c.b16 %v1315, %v1315
        %v1320 = vpack.c.b16 %v1316, %v1316
        %v1321 = vpack.c.b16 %v1317, %v1317
        %v1322 = vpack.c.b16 %v1318, %v1318
        %1327 = vst [vmem:[%s617] sm:$0xf] %v1319
        %1328 = vst [vmem:[%s617 + $0x4] sm:$0xf] %v1320
        %1329 = vst [vmem:[%s617 + $0x8] sm:$0xf] %v1321
        %1330 = vst [vmem:[%s617 + $0xc] sm:$0xf] %v1322
        %p1331 = scmp.lt.s32.totalorder %s38, 1
        // Predicated region
        $region93: #{tpu_custom_call.1} parent=75 // pred_check
          %p1332 = pneg %p1331
        $region94: #{tpu_custom_call.1} parent=75 // pred_check_branch
          %1334 = sbr.rel (%p1332) target = $region96
        $region95: #{tpu_custom_call.1} parent=75 // pred_region
          %v1335 = vld [vmem:[#allocation4] sm:$0x1]
          %v1336 = vadd.f32 %v1165, %v1166
          %v1337 = vadd.f32 %v1336, %v1167
          %v1338 = vadd.f32 %v1337, %v1168
          %v1339 = vrot.slane %v1338, 4
          %v1340 = vadd.f32 %v1338, %v1339
          %v1341 = vrot.slane %v1340, 2
          %v1342 = vadd.f32 %v1340, %v1341
          %v1343 = vrot.slane %v1342, 1
          %v1344 = vadd.f32 %v1342, %v1343
          %v1345 = vadd.f32 %v1335, %v1344
          %1346 = vst [vmem:[#allocation4] sm:$0x1] %v1345
          %v1347 = vld [vmem:[#allocation5] sm:$0x1]
          %v1348 = vmul.f32 %v1165, %v1165
          %v1349 = vmul.f32 %v1166, %v1166
          %v1350 = vmul.f32 %v1167, %v1167
          %v1351 = vmul.f32 %v1168, %v1168
          %v1352 = vadd.f32 %v1348, %v1349
          %v1353 = vadd.f32 %v1352, %v1350
          %v1354 = vadd.f32 %v1353, %v1351
          %v1355 = vrot.slane %v1354, 4
          %v1356 = vadd.f32 %v1354, %v1355
          %v1357 = vrot.slane %v1356, 2
          %v1358 = vadd.f32 %v1356, %v1357
          %v1359 = vrot.slane %v1358, 1
          %v1360 = vadd.f32 %v1358, %v1359
          %v1361 = vadd.f32 %v1347, %v1360
          %1362 = vst [vmem:[#allocation5] sm:$0x1] %v1361
        $region96: #{tpu_custom_call.1} parent=75 // pred_fallthru
          _
        // Predicated region
        $region97: #{tpu_custom_call.1} parent=75 // pred_check
          %p1363 = pneg %p637
        $region98: #{tpu_custom_call.1} parent=75 // pred_check_branch
          %1365 = sbr.rel (%p1363) target = $region100
        $region99: #{tpu_custom_call.1} parent=75 // pred_region
          %v1366 = vlaneseq
          %v1367 = vshrl.u32 %v1366, 7
          %v1368 = vadd.s32 %v1367, 8
          %v1369 = vadd.s32 %v1367, 16
          %v1370 = vadd.s32 %v1367, 24
          %s1371 = smul.u32 %s38, 32
          %v1372 = vstv %s1371
          %v1373 = vadd.s32 %v1367, %v1372
          %v1374 = vadd.s32 %v1368, %v1372
          %v1375 = vadd.s32 %v1369, %v1372
          %v1376 = vadd.s32 %v1370, %v1372
          %vm1377 = vcmp.lt.s32.totalorder %v1373, 64
          %vm1378 = vcmp.lt.s32.totalorder %v1374, 64
          %vm1379 = vcmp.lt.s32.totalorder %v1375, 64
          %vm1380 = vcmp.lt.s32.totalorder %v1376, 64
          %v1381 = vsel %vm1377, 1, 0
          %v1382 = vsel %vm1378, 1, 0
          %v1383 = vsel %vm1379, 1, 0
          %v1384 = vsel %vm1380, 1, 0
          %v1385 = vcvt.s32.f32 %v1381
          %v1386 = vcvt.s32.f32 %v1382
          %v1387 = vcvt.s32.f32 %v1383
          %v1388 = vcvt.s32.f32 %v1384
          %v1389 = vld [vmem:[#allocation4] sm:$0x1]
          %v1390 = vmul.f32 %v1165, %v1385
          %v1391 = vmul.f32 %v1166, %v1386
          %v1392 = vmul.f32 %v1167, %v1387
          %v1393 = vmul.f32 %v1168, %v1388
          %v1394 = vadd.f32 %v1390, %v1391
          %v1395 = vadd.f32 %v1394, %v1392
          %v1396 = vadd.f32 %v1395, %v1393
          %v1397 = vrot.slane %v1396, 4
          %v1398 = vadd.f32 %v1396, %v1397
          %v1399 = vrot.slane %v1398, 2
          %v1400 = vadd.f32 %v1398, %v1399
          %v1401 = vrot.slane %v1400, 1
          %v1402 = vadd.f32 %v1400, %v1401
          %v1403 = vadd.f32 %v1389, %v1402
          %1404 = vst [vmem:[#allocation4] sm:$0x1] %v1403
          %v1405 = vld [vmem:[#allocation5] sm:$0x1]
          %v1406 = vmul.f32 %v1165, %v1165
          %v1407 = vmul.f32 %v1166, %v1166
          %v1408 = vmul.f32 %v1167, %v1167
          %v1409 = vmul.f32 %v1168, %v1168
          %v1410 = vmul.f32 %v1406, %v1385
          %v1411 = vmul.f32 %v1407, %v1386
          %v1412 = vmul.f32 %v1408, %v1387
          %v1413 = vmul.f32 %v1409, %v1388
          %v1414 = vadd.f32 %v1410, %v1411
          %v1415 = vadd.f32 %v1414, %v1412
          %v1416 = vadd.f32 %v1415, %v1413
          %v1417 = vrot.slane %v1416, 4
          %v1418 = vadd.f32 %v1416, %v1417
          %v1419 = vrot.slane %v1418, 2
          %v1420 = vadd.f32 %v1418, %v1419
          %v1421 = vrot.slane %v1420, 1
          %v1422 = vadd.f32 %v1420, %v1421
          %v1423 = vadd.f32 %v1405, %v1422
          %1424 = vst [vmem:[#allocation5] sm:$0x1] %v1423
          %v1425 = vld [vmem:[#allocation3] sm:$0xff]
          %v1426 = vld [vmem:[#allocation3 + $0x10] sm:$0xff]
          %v1427 = vld [vmem:[#allocation3 + $0x8] sm:$0xff]
          %v1428 = vld [vmem:[#allocation3 + $0x18] sm:$0xff]
          %v1429 = vadd.f32 %v1427, 1e-06
          %v1430 = vadd.f32 %v1428, 1e-06
          %v1431 = vrcp.pop %v1429
          %v1432 = vmul.f32 %v1425, %v1431
          %v1433 = vrcp.pop %v1430
          %v1434 = vmul.f32 %v1426, %v1433
          %v1435 = vld [vmem:[%s0] sm:$0xff]
          %v1436 = vld [vmem:[%s0 + $0x8] sm:$0xff]
          %v1437 = vld [vmem:[#allocation11] sm:$0xff]
          %v1438 = vld [vmem:[#allocation11 + $0x8] sm:$0xff]
          %v1439 = vld [vmem:[#allocation11 + $0x10] sm:$0xff]
          %v1440 = vld [vmem:[#allocation11 + $0x18] sm:$0xff]
          %v1441 = vld [vmem:[#allocation11 + $0x20] sm:$0xff]
          %v1442 = vld [vmem:[#allocation11 + $0x28] sm:$0xff]
          %v1443 = vld [vmem:[#allocation11 + $0x30] sm:$0xff]
          %v1444 = vld [vmem:[#allocation11 + $0x38] sm:$0xff]
          %v1445 = vld [vmem:[#allocation11 + $0x40] sm:$0xff]
          %v1446 = vld [vmem:[#allocation11 + $0x48] sm:$0xff]
          %v1447 = vld [vmem:[#allocation11 + $0x50] sm:$0xff]
          %v1448 = vld [vmem:[#allocation11 + $0x58] sm:$0xff]
          %v1449 = vld [vmem:[#allocation11 + $0x60] sm:$0xff]
          %v1450 = vld [vmem:[#allocation11 + $0x68] sm:$0xff]
          %v1451 = vld [vmem:[#allocation11 + $0x70] sm:$0xff]
          %v1452 = vld [vmem:[#allocation11 + $0x78] sm:$0xff]
          %v1453 = vld [vmem:[%s9] sm:$0x1]
          %v1455 = vlaneseq
          %v1456 = vshrl.u32 %v1455, 7
          %v1457 = vsub.s32 0, %v1456
          %v1458 = vrot.slane %v1453, %v1457
          %1460 = vmatprep.subr.mxu0 0.0
          %1461 = vmatpush1.msra.mxu0 %v1437
          %1462 = vmatprep.subr.mxu0 0.0
          %1463 = vmatpush1.msra.mxu0 %v1438
          %1464 = vmatprep.subr.mxu0 0.0
          %1465 = vmatpush1.msra.mxu0 %v1439
          %1466 = vmatprep.subr.mxu0 0.0
          %1467 = vmatpush1.msra.mxu0 %v1440
          %1468 = vmatprep.subr.mxu0 0.0
          %1469 = vmatpush1.msra.mxu0 %v1441
          %1470 = vmatprep.subr.mxu0 0.0
          %1471 = vmatpush1.msra.mxu0 %v1442
          %1472 = vmatprep.subr.mxu0 0.0
          %1473 = vmatpush1.msra.mxu0 %v1443
          %1474 = vmatprep.subr.mxu0 0.0
          %1475 = vmatpush1.msra.mxu0 %v1444
          %1476 = vmatprep.subr.mxu0 0.0
          %1477 = vmatpush1.msra.mxu0 %v1445
          %1478 = vmatprep.subr.mxu0 0.0
          %1479 = vmatpush1.msra.mxu0 %v1446
          %1480 = vmatprep.subr.mxu0 0.0
          %1481 = vmatpush1.msra.mxu0 %v1447
          %1482 = vmatprep.subr.mxu0 0.0
          %1483 = vmatpush1.msra.mxu0 %v1448
          %1484 = vmatprep.subr.mxu0 0.0
          %1485 = vmatpush1.msra.mxu0 %v1449
          %1486 = vmatprep.subr.mxu0 0.0
          %1487 = vmatpush1.msra.mxu0 %v1450
          %1488 = vmatprep.subr.mxu0 0.0
          %1489 = vmatpush1.msra.mxu0 %v1451
          %1490 = vmatprep.subr.mxu0 0.0
          %1491 = vmatpush1.msra.mxu0 %v1452
          %1492 = vmatprep.subr.mxu0 0.0
          %1493 = vmatpush1.msra.mxu0 0.0
          %1494 = vmatprep.subr.mxu0 0.0
          %1495 = vmatpush1.msra.mxu0 0.0
          %1496 = vmatprep.subr.mxu0 0.0
          %1497 = vmatpush1.msra.mxu0 0.0
          %1498 = vmatprep.subr.mxu0 0.0
          %1499 = vmatpush1.msra.mxu0 0.0
          %1500 = vmatprep.subr.mxu0 0.0
          %1501 = vmatpush1.msra.mxu0 0.0
          %1502 = vmatprep.subr.mxu0 0.0
          %1503 = vmatpush1.msra.mxu0 0.0
          %1504 = vmatprep.subr.mxu0 0.0
          %1505 = vmatpush1.msra.mxu0 0.0
          %1506 = vmatprep.subr.mxu0 0.0
          %1507 = vmatpush1.msra.mxu0 0.0
          %1508 = vmatprep.subr.mxu0 0.0
          %1509 = vmatpush1.msra.mxu0 0.0
          %1510 = vmatprep.subr.mxu0 0.0
          %1511 = vmatpush1.msra.mxu0 0.0
          %1512 = vmatprep.subr.mxu0 0.0
          %1513 = vmatpush1.msra.mxu0 0.0
          %1514 = vmatprep.subr.mxu0 0.0
          %1515 = vmatpush1.msra.mxu0 0.0
          %1516 = vmatprep.subr.mxu0 0.0
          %1517 = vmatpush1.msra.mxu0 0.0
          %1518 = vmatprep.subr.mxu0 0.0
          %1519 = vmatpush1.msra.mxu0 0.0
          %1520 = vmatprep.subr.mxu0 0.0
          %1521 = vmatpush1.msra.mxu0 0.0
          %1522 = vmatprep.subr.mxu0 0.0
          %1523 = vmatpush1.msra.mxu0 0.0
          %1524 = vmatprep.mubr.f32.mxu0 0.0
          %1525 = vmatmul.mubr.f32.gmra.mrb[0].mxu0 %v1435
          %v1526 = vpop.f32.mrb[0].mxu0
          %v1527 = vadd.f32 %v1458, %v1526
          %v1528 = vpop.f32.mrb[0].mxu0
          %1529 = vmatprep.mubr.f32.mxu0 0.0
          %1530 = vmatmul.mubr.f32.gmra.mrb[0].mxu0 %v1436
          %v1531 = vpop.f32.mrb[0].mxu0
          %v1532 = vadd.f32 %v1458, %v1531
          %v1533 = vpop.f32.mrb[0].mxu0
          %1534 = vdwg.mxu0
          %v1535 = vadd.f32 %v1527, %v1432
          %v1536 = vadd.f32 %v1532, %v1434
          %v1537 = vadd.f32 %v1535, %v1536
          %v1538 = vrot.slane %v1537, 4
          %v1539 = vadd.f32 %v1537, %v1538
          %v1540 = vrot.slane %v1539, 2
          %v1541 = vadd.f32 %v1539, %v1540
          %v1542 = vrot.slane %v1541, 1
          %v1543 = vadd.f32 %v1541, %v1542
          %v1544 = vrcp.pop 16.0
          %v1545 = vmul.f32 %v1543, %v1544
          %v1546 = vsub.f32 %v1535, %v1545
          %v1547 = vsub.f32 %v1536, %v1545
          %v1548 = vmul.f32 %v1546, %v1546
          %v1549 = vmul.f32 %v1547, %v1547
          %v1550 = vadd.f32 %v1548, %v1549
          %v1551 = vrot.slane %v1550, 4
          %v1552 = vadd.f32 %v1550, %v1551
          %v1553 = vrot.slane %v1552, 2
          %v1554 = vadd.f32 %v1552, %v1553
          %v1555 = vrot.slane %v1554, 1
          %v1556 = vadd.f32 %v1554, %v1555
          %v1557 = vmul.f32 %v1556, %v1544
          %v1558 = vld [vmem:[%s10] sm:$0x1]
          %v1560 = vlaneseq
          %v1561 = vshrl.u32 %v1560, 7
          %v1562 = vsub.s32 0, %v1561
          %v1563 = vrot.slane %v1558, %v1562
          %v1565 = vmul.f32 %v1563, %v1546
          %v1566 = vmul.f32 %v1563, %v1547
          %v1567 = vadd.f32 %v1557, 1e-05
          %v1568 = vrsqrt.pop %v1567
          %v1569 = vmul.f32 %v1565, %v1568
          %v1570 = vmul.f32 %v1566, %v1568
          %v1571 = vld [vmem:[%s11] sm:$0x1]
          %v1573 = vlaneseq
          %v1574 = vshrl.u32 %v1573, 7
          %v1575 = vsub.s32 0, %v1574
          %v1576 = vrot.slane %v1571, %v1575
          %v1578 = vadd.f32 %v1569, %v1576
          %v1579 = vadd.f32 %v1570, %v1576
          %v1580 = vsub.f32 0.0, %v1578
          %v1581 = vsub.f32 0.0, %v1579
          %v1582 = vmul.f32 %v1580, 1.442695
          %v1583 = vpow.pop %v1582
          %v1584 = vmul.f32 %v1581, 1.442695
          %v1585 = vpow.pop %v1584
          %v1586 = vadd.f32 %v1583, 1.0
          %v1587 = vadd.f32 %v1585, 1.0
          %v1588 = vrcp.pop %v1586
          %v1589 = vrcp.pop %v1587
          %v1590 = vmul.f32 %v1578, %v1588
          %v1591 = vmul.f32 %v1579, %v1589
          %v1592 = vadd.f32 %v1435, %v1590
          %v1593 = vadd.f32 %v1436, %v1591
          %1594 = vst [vmem:[#allocation12] sm:$0xff] %v1592
          %1595 = vst [vmem:[#allocation12 + $0x8] sm:$0xff] %v1593
          %v1596 = vld [vmem:[#allocation4] sm:$0x1]
          %v1597 = vmul.f32 %v1596, 0.015625
          %v1598 = vld [vmem:[#allocation5] sm:$0x1]
          %v1599 = vmul.f32 %v1598, 0.015625
          %v1600 = vmul.f32 %v1597, %v1597
          %v1601 = vsub.f32 %v1599, %v1600
          %v1602 = vmax.f32 %v1601, 0.0
          %v1603 = vld [vmem:[%s12] sm:$0x1]
          %v1604 = vadd.f32 %v1602, 1e-05
          %v1605 = vrsqrt.pop %v1604
          %v1606 = vmul.f32 %v1603, %v1605
          %1607 = vst [vmem:[#allocation15] sm:$0x1] %v1606
          %v1608 = vld [vmem:[%s13] sm:$0x1]
          %v1609 = vmul.f32 %v1597, %v1606
          %v1610 = vsub.f32 %v1608, %v1609
          %1611 = vst [vmem:[#allocation16] sm:$0x1] %v1610
        $region100: #{tpu_custom_call.1} parent=75 // pred_fallthru
          _
        %s1612 = sand.u32 %s38, 1
        %s1613 = scalar_lea.sflag [#allocation14], %s1612
        %s1614 = sand.u32 %s376, 1
        %s1615 = smul.addr %s1614, 16
        %s1616 = scalar_lea.vmem [#allocation13], %s1615
        // Predicated region
        $region101: #{tpu_custom_call.1} parent=75 // pred_check
          %p1617 = pneg %p360
        $region102: #{tpu_custom_call.1} parent=75 // pred_check_branch
          %1619 = sbr.rel (%p1617) target = $region104
        $region103: #{tpu_custom_call.1} parent=75 // pred_region
          %s1621 = ssub.s32 256, 256
          %1622 = vsyncadd [#allocation8], %s1621
          %s1623 = sshll.u32 [#allocation12], 4
          %s1624 = int_to_ptr.vmem [resolvable:$true] %s1623
          %1629 = dma.vmem_to_hbm [thread:$0]  %s1624, 256, %s14, [#allocation8], 128, 128, 8
        $region104: #{tpu_custom_call.1} parent=75 // pred_fallthru
          _
        // Predicated region
        $region105: #{tpu_custom_call.1} parent=75 // pred_check
          %p1630 = pneg %p386
        $region106: #{tpu_custom_call.1} parent=75 // pred_check_branch
          %1632 = sbr.rel (%p1630) target = $region108
        $region107: #{tpu_custom_call.1} parent=75 // pred_region
          %s1633 = smul.u32 4, %s38
          %s1635 = ssub.s32 256, 256
          %1636 = vsyncadd %s1613, %s1635
          %s1637 = smul.addr %s1633, 64
          %s1638 = scalar_lea.hbm %s15, %s1637
          %s1639 = sshll.u32 %s1616, 4
          %s1640 = int_to_ptr.vmem [resolvable:$true] %s1639
          %1645 = dma.vmem_to_hbm [thread:$0]  %s1640, 256, %s1638, %s1613, 64, 64, 4
        $region108: #{tpu_custom_call.1} parent=75 // pred_fallthru
          _
        // Predicated region
        $region109: #{tpu_custom_call.1} parent=75 // pred_check
          %p1646 = pneg %p407
        $region110: #{tpu_custom_call.1} parent=75 // pred_check_branch
          %1648 = sbr.rel (%p1646) target = $region112
        $region111: #{tpu_custom_call.1} parent=75 // pred_region
          %s1650 = ssub.s32 16, 16
          %1651 = vsyncadd [#allocation14], %s1650
          %s1653 = sshll.u32 [#allocation15], 4
          %s1654 = int_to_ptr.vmem [resolvable:$true] %s1653
          %1656 = dma.vmem_to_hbm [thread:$0]  %s1654, 16, %s16, [#allocation14]
        $region112: #{tpu_custom_call.1} parent=75 // pred_fallthru
          _
        // Predicated region
        $region113: #{tpu_custom_call.1} parent=75 // pred_check
          %p1657 = pneg %p428
        $region114: #{tpu_custom_call.1} parent=75 // pred_check_branch
          %1659 = sbr.rel (%p1657) target = $region116
        $region115: #{tpu_custom_call.1} parent=75 // pred_region
          %s1661 = ssub.s32 16, 16
          %1662 = vsyncadd [#allocation17], %s1661
          %s1664 = sshll.u32 [#allocation16], 4
          %s1665 = int_to_ptr.vmem [resolvable:$true] %s1664
          %1667 = dma.vmem_to_hbm [thread:$0]  %s1665, 16, %s17, [#allocation17]
        $region116: #{tpu_custom_call.1} parent=75 // pred_fallthru
          _
        // Predicated region
        $region117: #{tpu_custom_call.1} parent=75 // pred_check
          %p1668 = pneg %p360
        $region118: #{tpu_custom_call.1} parent=75 // pred_check_branch
          %1670 = sbr.rel (%p1668) target = $region120
        $region119: #{tpu_custom_call.1} parent=75 // pred_region
          %1671 = dma.done [#allocation8], 256
        $region120: #{tpu_custom_call.1} parent=75 // pred_fallthru
          _
        // Predicated region
        $region121: #{tpu_custom_call.1} parent=75 // pred_check
          %p1672 = pneg %p407
        $region122: #{tpu_custom_call.1} parent=75 // pred_check_branch
          %1674 = sbr.rel (%p1672) target = $region124
        $region123: #{tpu_custom_call.1} parent=75 // pred_region
          %1675 = dma.done [#allocation14], 16
        $region124: #{tpu_custom_call.1} parent=75 // pred_fallthru
          _
        // Predicated region
        $region125: #{tpu_custom_call.1} parent=75 // pred_check
          %p1676 = pneg %p428
        $region126: #{tpu_custom_call.1} parent=75 // pred_check_branch
          %1678 = sbr.rel (%p1676) target = $region128
        $region127: #{tpu_custom_call.1} parent=75 // pred_region
          %1679 = dma.done [#allocation17], 16
        $region128: #{tpu_custom_call.1} parent=75 // pred_fallthru
          _
      $region76: #{tpu_custom_call.1} parent=5 // pred_fallthru
        _
      %p1680 = scmp.le.s32.totalorder 2, %s33
      // Predicated region
      $region129: #{tpu_custom_call.1} parent=5 // pred_check
        %p1681 = pneg %p1680
      $region130: #{tpu_custom_call.1} parent=5 // pred_check_branch
        %1683 = sbr.rel (%p1681) target = $region132
      $region131: #{tpu_custom_call.1} parent=5 // pred_region
        %s1684 = ssub.s32 %s33, 2
        // Predicated region
        $region133: #{tpu_custom_call.1} parent=131 // pred_check
          %p1685 = pneg %p392
        $region134: #{tpu_custom_call.1} parent=131 // pred_check_branch
          %1687 = sbr.rel (%p1685) target = $region136
        $region135: #{tpu_custom_call.1} parent=131 // pred_region
          %s1688 = sand.u32 %s39, 1
          %s1689 = scalar_lea.sflag [#allocation14], %s1688
          %s1690 = sand.u32 %s377, 1
          %s1691 = smul.addr %s1690, 16
          %s1692 = scalar_lea.vmem [#allocation13], %s1691
          %1693 = dma.done %s1689, 256
        $region136: #{tpu_custom_call.1} parent=131 // pred_fallthru
          _
      $region132: #{tpu_custom_call.1} parent=5 // pred_fallthru
        _
    $region6: #{tpu_custom_call.1} parent=1 // loop_footer
      %s37 = sadd.s32 1, %s33
    $region7: #{tpu_custom_call.1} parent=1 // loop_footer_branch
      %32 = sbr.rel target = $region3
    $region8: #{tpu_custom_call.1} parent=1 // loop_exit
      _
    %1694 = vsyncpa [#allocation7], 1
    %s1695 = scalar_lea.sflag [#allocation7], 1
    %1696 = vsyncpa %s1695, 1
    %1697 = vsyncpa [#allocation10], 1
    %1698 = vsyncpa [#allocation8], 1
    %s1699 = scalar_lea.sflag [#allocation8], 1
    %1700 = vsyncpa %s1699, 1
    %1701 = vsyncpa [#allocation14], 1
    %s1702 = scalar_lea.sflag [#allocation14], 1
    %1703 = vsyncpa %s1702, 1
    %1704 = vsyncpa [#allocation17], 1

</llo_original>
